<compile_context>
chip_gen: v6e
topology: v6e:2x2x1
jax: 0.10.0
libtpu: 0.0.40
codegen_flags: <defaults>
</compile_context>

<pallas_src>
import functools

import jax
import jax.numpy as jnp
from jax.experimental import pallas as pl
from jax.experimental.pallas import tpu as pltpu

_LANE = 128


def _round_up(v, m):
    return (v + m - 1) // m * m


def _pick_row_tile(ho):
    """Largest power-of-two row tile that divides Ho and gives >=2 tiles."""
    for cand in (32, 16, 8, 4, 2, 1):
        if ho % cand == 0 and ho // cand >= 2:
            return cand
    return ho


def _aspp_kernel(x_ref, w_ref, b_ref, o_ref, *, kh_size, kw_size, dilation,
                 t_rows):
    """One grid step = one (batch, row-tile).

    x_ref: (1, Hp, Wp, Cin_p)          padded input image (bf16, VMEM, resident per batch)
    w_ref: (KH*KW*Cin_p, Cout_p)       BN-folded conv weight, im2col layout (bf16)
    b_ref: (1, Cout_p)                 folded BN/conv bias (f32)
    o_ref: (1, t_rows, Wo, Cout_p)     output row tile (f32)
    """
    r = pl.program_id(1)
    _, t_h, w_o, cout_p = o_ref.shape
    cin_p = x_ref.shape[3]

    row0 = pl.multiple_of(r * t_rows, t_rows)

    # Build the im2col patch block: (t_h*Wo, KH*KW*Cin_p), tap order (kh, kw)
    # matching the weight reshape in the wrapper.
    taps = []
    for kh in range(kh_size):
        rows = x_ref[0, pl.ds(row0 + kh * dilation, t_h), :, :]  # (t_h, Wp, Cin_p)
        for kw in range(kw_size):
            tap = rows[:, kw * dilation: kw * dilation + w_o, :]  # (t_h, Wo, Cin_p)
            taps.append(tap.reshape(t_h * w_o, cin_p))
    patch = jnp.concatenate(taps, axis=-1)                        # (t_h*Wo, K)

    # Single large-K MXU contraction, f32 accumulation.
    acc = jnp.dot(patch, w_ref[...], preferred_element_type=jnp.float32)

    # Fused (folded) bias + ReLU epilogue; lane-dense unmasked store.
    y = jnp.maximum(acc + b_ref[...], 0.0)
    o_ref[0] = y.reshape(t_h, w_o, cout_p).astype(o_ref.dtype)


def aspp_module_forward(x_nchw, weight_oihw, conv_bias, bn_gamma, bn_beta,
                        bn_mean, bn_var, *, padding, dilation, eps=1e-5):
    """Pallas implementation of _ASPPModule.forward (NCHW in / NCHW out)."""
    N, Cin, H, W = x_nchw.shape
    Cout, _, KH, KW = weight_oihw.shape

    Hp = H + 2 * padding
    Wp = W + 2 * padding
    Ho = Hp - dilation * (KH - 1)   # stride = 1
    Wo = Wp - dilation * (KW - 1)

    cin_p = _round_up(Cin, _LANE)
    cout_p = _round_up(Cout, _LANE)

    # ---- Fold BN (inference) + conv bias; push the scale into the weight ----
    inv_std = 1.0 / jnp.sqrt(bn_var.astype(jnp.float32) + eps)
    scale = bn_gamma.astype(jnp.float32) * inv_std                          # (Cout,)
    bias = bn_beta.astype(jnp.float32) + (
        conv_bias.astype(jnp.float32) - bn_mean.astype(jnp.float32)) * scale

    w_hwio = jnp.transpose(weight_oihw.astype(jnp.float32), (2, 3, 1, 0))   # (KH,KW,Cin,Cout)
    w_hwio = w_hwio * scale[None, None, None, :]
    w_hwio = jnp.pad(w_hwio,
                     ((0, 0), (0, 0), (0, cin_p - Cin), (0, cout_p - Cout)))
    w2d = w_hwio.reshape(KH * KW * cin_p, cout_p).astype(jnp.bfloat16)

    bias2d = jnp.pad(bias, (0, cout_p - Cout)).reshape(1, cout_p)

    # ---- Input: NCHW -> NHWC, spatial zero pad, lane-dense channel pad, bf16
    # TODO(synk): at production sizes do padding / halo fetch inside the kernel
    #             (memory_space=pl.ANY + manual DMA) to save this HBM pass.
    x_nhwc = jnp.transpose(x_nchw, (0, 2, 3, 1))
    x_pad = jnp.pad(x_nhwc, ((0, 0), (padding, padding),
                             (padding, padding), (0, cin_p - Cin)))
    x_pad = x_pad.astype(jnp.bfloat16)

    t_rows = _pick_row_tile(Ho)
    n_row_tiles = Ho // t_rows

    kernel = functools.partial(_aspp_kernel, kh_size=KH, kw_size=KW,
                               dilation=dilation, t_rows=t_rows)

    out_nhwc = pl.pallas_call(
        kernel,
        out_shape=jax.ShapeDtypeStruct((N, Ho, Wo, cout_p), jnp.float32),
        grid_spec=pltpu.PrefetchScalarGridSpec(
            num_scalar_prefetch=0,
            grid=(N, n_row_tiles),
            in_specs=[
                # Padded image: block index depends only on n -> stays resident
                # in VMEM across all row tiles of that image.
                pl.BlockSpec((1, Hp, Wp, cin_p), lambda n, r: (n, 0, 0, 0)),
                # Folded weight (im2col layout) and bias: resident for the
                # whole grid (constant block index).
                pl.BlockSpec((KH * KW * cin_p, cout_p), lambda n, r: (0, 0)),
                pl.BlockSpec((1, cout_p), lambda n, r: (0, 0)),
            ],
            out_specs=pl.BlockSpec((1, t_rows, Wo, cout_p),
                                   lambda n, r: (n, r, 0, 0)),
        ),
        compiler_params=pltpu.CompilerParams(
            dimension_semantics=("parallel", "parallel"),
            vmem_limit_bytes=48 * 1024 * 1024),
    )(x_pad, w2d, bias2d)

    # Drop channel padding, back to NCHW like the PyTorch module.
    return jnp.transpose(out_nhwc[:, :, :, :Cout], (0, 3, 1, 2))


def _reference_forward(x_nchw, weight_oihw, conv_bias, bn_gamma, bn_beta,
                       bn_mean, bn_var, *, padding, dilation, eps=1e-5):
    """Pure-JAX f32 reference (lax conv) for correctness checking."""
    y = jax.lax.conv_general_dilated(
        x_nchw, weight_oihw,
        window_strides=(1, 1),
        padding=((padding, padding), (padding, padding)),
        rhs_dilation=(dilation, dilation),
        dimension_numbers=("NCHW", "OIHW", "NCHW"))
    y = y + conv_bias.reshape(1, -1, 1, 1)
    y = (y - bn_mean.reshape(1, -1, 1, 1)) / jnp.sqrt(
        bn_var.reshape(1, -1, 1, 1) + eps)
    y = y * bn_gamma.reshape(1, -1, 1, 1) + bn_beta.reshape(1, -1, 1, 1)
    return jnp.maximum(y, 0.0)


def _reference_forward_bf16(x_nchw, weight_oihw, conv_bias, bn_gamma, bn_beta,
                            bn_mean, bn_var, *, padding, dilation, eps=1e-5):
    """Reference with the same bf16 rounding of x / folded weight as the kernel."""
    inv_std = 1.0 / jnp.sqrt(bn_var + eps)
    scale = bn_gamma * inv_std
    w_f = (weight_oihw * scale[:, None, None, None]
           ).astype(jnp.bfloat16).astype(jnp.float32)
    b_f = bn_beta + (conv_bias - bn_mean) * scale
    xq = x_nchw.astype(jnp.bfloat16).astype(jnp.float32)
    y = jax.lax.conv_general_dilated(
        xq, w_f,
        window_strides=(1, 1),
        padding=((padding, padding), (padding, padding)),
        rhs_dilation=(dilation, dilation),
        dimension_numbers=("NCHW", "OIHW", "NCHW"))
    y = y + b_f.reshape(1, -1, 1, 1)
    return jnp.maximum(y, 0.0)


if __name__ == "__main__":
    # Small shapes consistent with _ASPPModule(inc=4, outc=8, kernel_size=3,
    # padding=2, dilation=2) on a (2, 4, 16, 16) input.
    N, Cin, H, W = 2, 4, 16, 16
    Cout, KH, KW = 8, 3, 3
    padding, dilation = 2, 2

    key = jax.random.PRNGKey(0)
    kx, kw, _ = jax.random.split(key, 3)

    x = jax.random.normal(kx, (N, Cin, H, W), dtype=jnp.float32)

    # kaiming_normal_-style init: N(0, sqrt(2 / fan_in)), fan_in = Cin*KH*KW.
    fan_in = Cin * KH * KW
    weight = jax.random.normal(kw, (Cout, Cin, KH, KW),
                               dtype=jnp.float32) * jnp.sqrt(2.0 / fan_in)
    conv_bias = jnp.zeros((Cout,), jnp.float32)

    # BatchNorm params exactly as after _weight_init on a fresh BN layer.
    bn_gamma = jnp.ones((Cout,), jnp.float32)
    bn_beta = jnp.zeros((Cout,), jnp.float32)
    bn_mean = jnp.zeros((Cout,), jnp.float32)
    bn_var = jnp.ones((Cout,), jnp.float32)

    out = aspp_module_forward(x, weight, conv_bias, bn_gamma, bn_beta,
                              bn_mean, bn_var,
                              padding=padding, dilation=dilation)
    out = jax.block_until_ready(out)

    ref32 = _reference_forward(x, weight, conv_bias, bn_gamma, bn_beta,
                               bn_mean, bn_var,
                               padding=padding, dilation=dilation)
    refbf = _reference_forward_bf16(x, weight, conv_bias, bn_gamma, bn_beta,
                                    bn_mean, bn_var,
                                    padding=padding, dilation=dilation)

    assert out.shape == ref32.shape
    # Tight check against a bf16-rounding-consistent reference ...
    assert jnp.allclose(out, refbf, atol=2e-3, rtol=2e-3)
    # ... and a looser check against the full-precision f32 reference.
    assert jnp.allclose(out, ref32, atol=5e-2, rtol=5e-2)

    print("KERNEL_OK")
</pallas_src>

<mosaic_0001>
module attributes {stable_mosaic.version = 11 : i64} {
  func.func @_aspp_kernel(%arg0: i32, %arg1: i32, %arg2: memref<1x20x20x128xbf16, #tpu.memory_space<vmem>>, %arg3: memref<1152x128xbf16, #tpu.memory_space<vmem>>, %arg4: memref<1x128xf32, #tpu.memory_space<vmem>>, %arg5: memref<1x8x16x128xf32, #tpu.memory_space<vmem>>) attributes {dimension_semantics = [#tpu.dimension_semantics<parallel>, #tpu.dimension_semantics<parallel>], iteration_bounds = array<i64: 2, 2>, scalar_prefetch = 0 : i64, scratch_operands = 0 : i64, tpu.core_type = #tpu.core_type<tc>, window_params = [{transform_indices = @transform_0, window_bounds = array<i64: 1, 20, 20, 128>}, {pipeline_mode = #tpu.pipeline_mode<synchronous>, transform_indices = @transform_1, window_bounds = array<i64: 1152, 128>}, {pipeline_mode = #tpu.pipeline_mode<synchronous>, transform_indices = @transform_2, window_bounds = array<i64: 1, 128>}, {transform_indices = @transform_3, window_bounds = array<i64: 1, 8, 16, 128>}]} {
    %c8_i32 = arith.constant 8 : i32
    %0 = arith.muli %arg1, %c8_i32 : i32
    %1 = tpu.assume_multiple %0, 8 : i32
    %c0_i32 = arith.constant 0 : i32
    %2 = arith.addi %1, %c0_i32 : i32
    %c0 = arith.constant 0 : index
    %3 = arith.index_cast %2 : i32 to index
    %c0_0 = arith.constant 0 : index
    %c0_1 = arith.constant 0 : index
    %4 = vector.load %arg2[%c0, %3, %c0_0, %c0_1] : memref<1x20x20x128xbf16, #tpu.memory_space<vmem>>, vector<1x8x20x128xbf16>
    %5 = vector.shape_cast %4 : vector<1x8x20x128xbf16> to vector<8x20x128xbf16>
    %6 = vector.extract_strided_slice %5 {offsets = [0, 0, 0], sizes = [8, 16, 128], strides = [1, 1, 1]} : vector<8x20x128xbf16> to vector<8x16x128xbf16>
    %7 = vector.shape_cast %6 : vector<8x16x128xbf16> to vector<128x128xbf16>
    %8 = vector.extract_strided_slice %5 {offsets = [0, 2, 0], sizes = [8, 16, 128], strides = [1, 1, 1]} : vector<8x20x128xbf16> to vector<8x16x128xbf16>
    %9 = vector.shape_cast %8 : vector<8x16x128xbf16> to vector<128x128xbf16>
    %10 = vector.extract_strided_slice %5 {offsets = [0, 4, 0], sizes = [8, 16, 128], strides = [1, 1, 1]} : vector<8x20x128xbf16> to vector<8x16x128xbf16>
    %11 = vector.shape_cast %10 : vector<8x16x128xbf16> to vector<128x128xbf16>
    %c2_i32 = arith.constant 2 : i32
    %12 = arith.addi %1, %c2_i32 : i32
    %c0_2 = arith.constant 0 : index
    %13 = arith.index_cast %12 : i32 to index
    %c0_3 = arith.constant 0 : index
    %c0_4 = arith.constant 0 : index
    %14 = vector.load %arg2[%c0_2, %13, %c0_3, %c0_4] : memref<1x20x20x128xbf16, #tpu.memory_space<vmem>>, vector<1x8x20x128xbf16>
    %15 = vector.shape_cast %14 : vector<1x8x20x128xbf16> to vector<8x20x128xbf16>
    %16 = vector.extract_strided_slice %15 {offsets = [0, 0, 0], sizes = [8, 16, 128], strides = [1, 1, 1]} : vector<8x20x128xbf16> to vector<8x16x128xbf16>
    %17 = vector.shape_cast %16 : vector<8x16x128xbf16> to vector<128x128xbf16>
    %18 = vector.extract_strided_slice %15 {offsets = [0, 2, 0], sizes = [8, 16, 128], strides = [1, 1, 1]} : vector<8x20x128xbf16> to vector<8x16x128xbf16>
    %19 = vector.shape_cast %18 : vector<8x16x128xbf16> to vector<128x128xbf16>
    %20 = vector.extract_strided_slice %15 {offsets = [0, 4, 0], sizes = [8, 16, 128], strides = [1, 1, 1]} : vector<8x20x128xbf16> to vector<8x16x128xbf16>
    %21 = vector.shape_cast %20 : vector<8x16x128xbf16> to vector<128x128xbf16>
    %c4_i32 = arith.constant 4 : i32
    %22 = arith.addi %1, %c4_i32 : i32
    %c0_5 = arith.constant 0 : index
    %23 = arith.index_cast %22 : i32 to index
    %c0_6 = arith.constant 0 : index
    %c0_7 = arith.constant 0 : index
    %24 = vector.load %arg2[%c0_5, %23, %c0_6, %c0_7] : memref<1x20x20x128xbf16, #tpu.memory_space<vmem>>, vector<1x8x20x128xbf16>
    %25 = vector.shape_cast %24 : vector<1x8x20x128xbf16> to vector<8x20x128xbf16>
    %26 = vector.extract_strided_slice %25 {offsets = [0, 0, 0], sizes = [8, 16, 128], strides = [1, 1, 1]} : vector<8x20x128xbf16> to vector<8x16x128xbf16>
    %27 = vector.shape_cast %26 : vector<8x16x128xbf16> to vector<128x128xbf16>
    %28 = vector.extract_strided_slice %25 {offsets = [0, 2, 0], sizes = [8, 16, 128], strides = [1, 1, 1]} : vector<8x20x128xbf16> to vector<8x16x128xbf16>
    %29 = vector.shape_cast %28 : vector<8x16x128xbf16> to vector<128x128xbf16>
    %30 = vector.extract_strided_slice %25 {offsets = [0, 4, 0], sizes = [8, 16, 128], strides = [1, 1, 1]} : vector<8x20x128xbf16> to vector<8x16x128xbf16>
    %31 = vector.shape_cast %30 : vector<8x16x128xbf16> to vector<128x128xbf16>
    %32 = tpu.concatenate %7, %9, %11, %17, %19, %21, %27, %29, %31 in 1 : vector<128x128xbf16>, vector<128x128xbf16>, vector<128x128xbf16>, vector<128x128xbf16>, vector<128x128xbf16>, vector<128x128xbf16>, vector<128x128xbf16>, vector<128x128xbf16>, vector<128x128xbf16> -> vector<128x1152xbf16>
    %c0_8 = arith.constant 0 : index
    %c0_9 = arith.constant 0 : index
    %33 = vector.load %arg3[%c0_8, %c0_9] : memref<1152x128xbf16, #tpu.memory_space<vmem>>, vector<1152x128xbf16>
    %cst = arith.constant dense<0.000000e+00> : vector<128x128xf32>
    %34 = tpu.matmul %32, %33, %cst {dimension_numbers = #tpu.dot_dimension_numbers<[1], [0], [0], [1], [0, 0, 1, 1], [], []>} : vector<128x1152xbf16>, vector<1152x128xbf16>, vector<128x128xf32> -> vector<128x128xf32>
    %c0_10 = arith.constant 0 : index
    %c0_11 = arith.constant 0 : index
    %35 = vector.load %arg4[%c0_10, %c0_11] : memref<1x128xf32, #tpu.memory_space<vmem>>, vector<1x128xf32>
    %36 = vector.broadcast %35 : vector<1x128xf32> to vector<128x128xf32>
    %37 = arith.addf %34, %36 : vector<128x128xf32>
    %cst_12 = arith.constant 0.000000e+00 : f32
    %38 = vector.broadcast %cst_12 : f32 to vector<128x128xf32>
    %39 = arith.maximumf %37, %38 : vector<128x128xf32>
    %40 = vector.shape_cast %39 : vector<128x128xf32> to vector<8x16x128xf32>
    %c0_13 = arith.constant 0 : index
    %c0_14 = arith.constant 0 : index
    %c0_15 = arith.constant 0 : index
    %c0_16 = arith.constant 0 : index
    %41 = vector.load %arg5[%c0_13, %c0_14, %c0_15, %c0_16] : memref<1x8x16x128xf32, #tpu.memory_space<vmem>>, vector<1x8x16x128xf32>
    %42 = vector.shape_cast %41 : vector<1x8x16x128xf32> to vector<8x16x128xf32>
    %43 = vector.shape_cast %40 : vector<8x16x128xf32> to vector<1x8x16x128xf32>
    tpu.vector_store %arg5[%c0_13, %c0_14, %c0_15, %c0_16], %43 {strides = array<i32>} : memref<1x8x16x128xf32, #tpu.memory_space<vmem>>, vector<1x8x16x128xf32>,
    return
  }
  func.func @transform_0(%arg0: i32, %arg1: i32) -> (i32, i32, i32, i32) {
    %c0_i32 = arith.constant 0 : i32
    %c0_i32_0 = arith.constant 0 : i32
    %c0_i32_1 = arith.constant 0 : i32
    %c0_i32_2 = arith.constant 0 : i32
    return %arg0, %c0_i32, %c0_i32_0, %c0_i32_1 : i32, i32, i32, i32
  }
  func.func @transform_1(%arg0: i32, %arg1: i32) -> (i32, i32) {
    %c0_i32 = arith.constant 0 : i32
    %c0_i32_0 = arith.constant 0 : i32
    %c0_i32_1 = arith.constant 0 : i32
    return %c0_i32, %c0_i32_0 : i32, i32
  }
  func.func @transform_2(%arg0: i32, %arg1: i32) -> (i32, i32) {
    %c0_i32 = arith.constant 0 : i32
    %c0_i32_0 = arith.constant 0 : i32
    %c0_i32_1 = arith.constant 0 : i32
    return %c0_i32, %c0_i32_0 : i32, i32
  }
  func.func @transform_3(%arg0: i32, %arg1: i32) -> (i32, i32, i32, i32) {
    %c0_i32 = arith.constant 0 : i32
    %c0_i32_0 = arith.constant 0 : i32
    %c0_i32_1 = arith.constant 0 : i32
    return %arg0, %arg1, %c0_i32, %c0_i32_0 : i32, i32, i32, i32
  }
}

</mosaic_0001>

<llo_original>
// kernel: tpu_custom_call.1
$region0: #{tpu_custom_call.1}
  #allocation0 [shape = 'u32[]', space=smem, size = 0x4, offset = 0x4, fixed_abs, tag = 'smem constant byte address 0x4 - core index']
  #allocation1 [shape = 'u32[144,128]{1,0:T(1,128)}', space=vmem, size = 0x12000, scoped, tag = 'internal scratch']
  %s0 = inlined_call_operand.vmem [shape: bf16[2,20,20,128], index: 0, kind: input, shape index: {}]
  %s1 = inlined_call_operand.vmem [shape: bf16[1152,128], index: 1, kind: input, shape index: {}]
  %s2 = inlined_call_operand.vmem [shape: f32[1,128], index: 2, kind: input, shape index: {}]
  %s3 = inlined_call_operand.hbm [shape: f32[2,16,16,128], index: 3, kind: output, shape index: {}]
  %s4 = sld [smem:[#allocation0]]
  $region45: #{tpu_custom_call.1} parent=0
    _
  %s6 = ssub.s32 1, %s4
  %s7 = scalar_select 0, %s6, %s4
  $region1: #{tpu_custom_call.1} parent=0
    #allocation2 [shape = 'u8[131072]{0}', space=vmem, size = 0x20000, scoped, tag = 'output window, operand 0']
    #allocation3 [shape = 's32[2]{0}', space=sflag, size = 0x8, scoped, tag = 'scoped memory for tpu_custom_call.1']
    %8 = vsyncpa [#allocation3], 0
    %s9 = scalar_lea.sflag [#allocation3], 1
    %10 = vsyncpa %s9, 0
    loop: start=0, step=1, limit=6
    $region2: #{tpu_custom_call.1} parent=1 // loop_pre_header
      _
    $region3: #{tpu_custom_call.1} parent=1 // loop_header
      %s12 = sphi 0, %s16
      %p13 = scmp.ge.s32.totalorder %s12, 6
      %s19 = sphi 0, %s31
      %s20 = sphi 0, %s27
      %s21 = sphi 0, %s19
      %s22 = sphi 0, %s20
      %s23 = sphi 0, %s21
      %s24 = sphi 0, %s22
      %s34 = sphi 0, %s36
      %s37 = sphi 0, %s34
      %s38 = sphi 0, %s37
      %s54 = sphi 0, %s38
      %s58 = sphi 0, %s58
      %s60 = sphi 0, %s58
      %s61 = sphi 0, %s60
      %s75 = sphi 0, %s61
      %s79 = sphi 0, %s79
      %s81 = sphi 0, %s79
      %s82 = sphi 0, %s81
      %s96 = sphi 0, %s82
      %s104 = sphi 0, %s106
      %s107 = sphi 0, %s104
      %s108 = sphi 0, %s107
      %s124 = sphi 0, %s108
    $region4: #{tpu_custom_call.1} parent=1 // loop_header_branch
      %15 = sbr.rel (%p13) target = $region8
    $region5: #{tpu_custom_call.1} parent=1 // loop_body
      %s17 = ssub.s32 %s12, 1
      %s18 = ssub.s32 %s12, 2
      %s25 = sadd.s32 1, %s20
      %p26 = scmp.ge.s32.totalorder %s25, 2
      %s27 = scalar_select %p26, 0, %s25
      %s28 = sadd.s32 1, %s19
      %s29 = scalar_select %p26, %s28, %s19
      %p30 = scmp.ge.s32.totalorder %s29, 2
      %s31 = scalar_select %p30, 0, %s29
      %s32 = ssub.s32 %s19, %s31
      %p33 = scmp.eq.s32.totalorder %s32, 0
      %s35 = sadd.s32 %s34, 1
      %s36 = scalar_select %p33, %s34, %s35
      %p39 = pneg %p33
      %p40 = scmp.eq.s32.totalorder %s12, 3
      %p41 = por %p39, %p40
      %p42 = scmp.ne.s32.totalorder %s34, %s37
      %p43 = scmp.eq.s32.totalorder %s12, 0
      %p44 = por %p42, %p43
      %p45 = scmp.ne.s32.totalorder %s34, %s37
      %p46 = scmp.eq.s32.totalorder %s17, 3
      %p47 = por %p45, %p46
      %p48 = scmp.ne.s32.totalorder %s37, %s38
      %p49 = scmp.eq.s32.totalorder %s17, 0
      %p50 = por %p48, %p49
      %p51 = scmp.ne.s32.totalorder %s37, %s38
      %p52 = scmp.eq.s32.totalorder %s18, 3
      %p53 = por %p51, %p52
      %p55 = scmp.ne.s32.totalorder %s38, %s54
      %p56 = scmp.eq.s32.totalorder %s18, 0
      %p57 = por %p55, %p56
      %s59 = sadd.s32 %s58, 1
      %p62 = scmp.eq.s32.totalorder %s12, 3
      %p63 = scmp.ne.s32.totalorder %s58, %s60
      %p64 = scmp.eq.s32.totalorder %s12, 0
      %p65 = por %p63, %p64
      %p66 = scmp.ne.s32.totalorder %s58, %s60
      %p67 = scmp.eq.s32.totalorder %s17, 3
      %p68 = por %p66, %p67
      %p69 = scmp.ne.s32.totalorder %s60, %s61
      %p70 = scmp.eq.s32.totalorder %s17, 0
      %p71 = por %p69, %p70
      %p72 = scmp.ne.s32.totalorder %s60, %s61
      %p73 = scmp.eq.s32.totalorder %s18, 3
      %p74 = por %p72, %p73
      %p76 = scmp.ne.s32.totalorder %s61, %s75
      %p77 = scmp.eq.s32.totalorder %s18, 0
      %p78 = por %p76, %p77
      %s80 = sadd.s32 %s79, 1
      %p83 = scmp.eq.s32.totalorder %s12, 3
      %p84 = scmp.ne.s32.totalorder %s79, %s81
      %p85 = scmp.eq.s32.totalorder %s12, 0
      %p86 = por %p84, %p85
      %p87 = scmp.ne.s32.totalorder %s79, %s81
      %p88 = scmp.eq.s32.totalorder %s17, 3
      %p89 = por %p87, %p88
      %p90 = scmp.ne.s32.totalorder %s81, %s82
      %p91 = scmp.eq.s32.totalorder %s17, 0
      %p92 = por %p90, %p91
      %p93 = scmp.ne.s32.totalorder %s81, %s82
      %p94 = scmp.eq.s32.totalorder %s18, 3
      %p95 = por %p93, %p94
      %p97 = scmp.ne.s32.totalorder %s82, %s96
      %p98 = scmp.eq.s32.totalorder %s18, 0
      %p99 = por %p97, %p98
      %s100 = ssub.s32 %s19, %s31
      %s101 = ssub.s32 %s20, %s27
      %s102 = sor.u32 %s100, %s101
      %p103 = scmp.eq.s32.totalorder %s102, 0
      %s105 = sadd.s32 %s104, 1
      %s106 = scalar_select %p103, %s104, %s105
      %p109 = pneg %p103
      %p110 = scmp.eq.s32.totalorder %s12, 3
      %p111 = por %p109, %p110
      %p112 = scmp.ne.s32.totalorder %s104, %s107
      %p113 = scmp.eq.s32.totalorder %s12, 0
      %p114 = por %p112, %p113
      %p115 = scmp.ne.s32.totalorder %s104, %s107
      %p116 = scmp.eq.s32.totalorder %s17, 3
      %p117 = por %p115, %p116
      %p118 = scmp.ne.s32.totalorder %s107, %s108
      %p119 = scmp.eq.s32.totalorder %s17, 0
      %p120 = por %p118, %p119
      %p121 = scmp.ne.s32.totalorder %s107, %s108
      %p122 = scmp.eq.s32.totalorder %s18, 3
      %p123 = por %p121, %p122
      %p125 = scmp.ne.s32.totalorder %s108, %s124
      %p126 = scmp.eq.s32.totalorder %s18, 0
      %p127 = por %p125, %p126
      %p128 = scmp.le.s32.totalorder 1, %s12
      %p129 = scmp.lt.s32.totalorder %s12, 5
      %p130 = pnand %p128, %p129
      %p131 = pneg %p130
      // Predicated region
      $region9: #{tpu_custom_call.1} parent=5 // pred_check
        _
      $region10: #{tpu_custom_call.1} parent=5 // pred_check_branch
        %133 = sbr.rel (%p130) target = $region12
      $region11: #{tpu_custom_call.1} parent=5 // pred_region
        %s134 = ssub.s32 %s12, 1
        // Predicated region
        $region13: #{tpu_custom_call.1} parent=11 // pred_check
          %p135 = pneg %p71
        $region14: #{tpu_custom_call.1} parent=11 // pred_check_branch
          %137 = sbr.rel (%p135) target = $region16
        $region15: #{tpu_custom_call.1} parent=11 // pred_region
          _
        $region16: #{tpu_custom_call.1} parent=11 // pred_fallthru
          _
        // Predicated region
        $region17: #{tpu_custom_call.1} parent=11 // pred_check
          %p138 = pneg %p92
        $region18: #{tpu_custom_call.1} parent=11 // pred_check_branch
          %140 = sbr.rel (%p138) target = $region20
        $region19: #{tpu_custom_call.1} parent=11 // pred_region
          _
        $region20: #{tpu_custom_call.1} parent=11 // pred_fallthru
          _
      $region12: #{tpu_custom_call.1} parent=5 // pred_fallthru
        _
      %p141 = scmp.lt.s32.totalorder %s12, 4
      // Predicated region
      $region21: #{tpu_custom_call.1} parent=5 // pred_check
        %p142 = pneg %p141
      $region22: #{tpu_custom_call.1} parent=5 // pred_check_branch
        %144 = sbr.rel (%p142) target = $region24
      $region23: #{tpu_custom_call.1} parent=5 // pred_region
        // Predicated region
        $region25: #{tpu_custom_call.1} parent=23 // pred_check
          %p145 = pneg %p44
        $region26: #{tpu_custom_call.1} parent=23 // pred_check_branch
          %147 = sbr.rel (%p145) target = $region28
        $region27: #{tpu_custom_call.1} parent=23 // pred_region
          %p148 = scmp.lt.s32.totalorder %s19, 1
          %s149 = scalar_select %p148, %s19, 1
          %s150 = smul.addr %s149, 60
          %s151 = smul.addr %s150, 4
          %s152 = scalar_lea.vmem %s0, %s151
        $region28: #{tpu_custom_call.1} parent=23 // pred_fallthru
          _
      $region24: #{tpu_custom_call.1} parent=5 // pred_fallthru
        _
      %p153 = scmp.le.s32.totalorder 1, %s12
      %p154 = scmp.lt.s32.totalorder %s12, 5
      %p155 = pnand %p153, %p154
      %p156 = pneg %p155
      // Predicated region
      $region29: #{tpu_custom_call.1} parent=5 // pred_check
        _
      $region30: #{tpu_custom_call.1} parent=5 // pred_check_branch
        %158 = sbr.rel (%p155) target = $region32
      $region31: #{tpu_custom_call.1} parent=5 // pred_region
        %s159 = ssub.s32 %s12, 1
        %p160 = scmp.lt.s32.totalorder %s21, 1
        %s161 = scalar_select %p160, %s21, 1
        %s162 = smul.addr %s161, 60
        %s163 = smul.addr %s162, 4
        %s164 = scalar_lea.vmem %s0, %s163
        %p165 = pneg %p50
        %p166 = pneg %p47
        %p167 = pneg %p71
        %p168 = pneg %p68
        %p169 = pneg %p92
        %p170 = pneg %p89
        %p171 = pneg %p120
        %p172 = pneg %p117
        %s173 = sand.u32 %s107, 1
        %s174 = scalar_lea.sflag [#allocation3], %s173
        %s175 = sand.u32 %s107, 1
        %s176 = smul.addr %s175, 128
        %s177 = scalar_lea.vmem [#allocation2], %s176
        %p178 = scmp.lt.s32.totalorder %s21, 1
        %s179 = scalar_select %p178, %s21, 1
        %s180 = smul.addr %s179, 60
        %s181 = smul.addr %s180, 4
        %s182 = scalar_lea.vmem %s0, %s181
        %s183 = smul.u32 8, %s22
        %s185 = smul.u32 %s22, 8
        %s186 = smul.u32 %s185, 3
        %s187 = smul.addr %s186, 4
        %s188 = scalar_lea.vmem %s182, %s187
        %v189 = vld [vmem:[%s188] sm:$0xf]
        %v190 = vld [vmem:[%s188 + $0x4] sm:$0xf]
        %v191 = vld [vmem:[%s188 + $0x8] sm:$0x3]
        %v192 = vld [vmem:[%s188 + $0xc] sm:$0xf]
        %v193 = vld [vmem:[%s188 + $0x10] sm:$0xf]
        %v194 = vld [vmem:[%s188 + $0x14] sm:$0x3]
        %v195 = vld [vmem:[%s188 + $0x18] sm:$0xf]
        %v196 = vld [vmem:[%s188 + $0x1c] sm:$0xf]
        %v197 = vld [vmem:[%s188 + $0x20] sm:$0x3]
        %v198 = vld [vmem:[%s188 + $0x24] sm:$0xf]
        %v199 = vld [vmem:[%s188 + $0x28] sm:$0xf]
        %v200 = vld [vmem:[%s188 + $0x2c] sm:$0x3]
        %v201 = vld [vmem:[%s188 + $0x30] sm:$0xf]
        %v202 = vld [vmem:[%s188 + $0x34] sm:$0xf]
        %v203 = vld [vmem:[%s188 + $0x38] sm:$0x3]
        %v204 = vld [vmem:[%s188 + $0x3c] sm:$0xf]
        %v205 = vld [vmem:[%s188 + $0x40] sm:$0xf]
        %v206 = vld [vmem:[%s188 + $0x44] sm:$0x3]
        %v207 = vld [vmem:[%s188 + $0x48] sm:$0xf]
        %v208 = vld [vmem:[%s188 + $0x4c] sm:$0xf]
        %v209 = vld [vmem:[%s188 + $0x50] sm:$0x3]
        %v210 = vld [vmem:[%s188 + $0x54] sm:$0xf]
        %v211 = vld [vmem:[%s188 + $0x58] sm:$0xf]
        %v212 = vld [vmem:[%s188 + $0x5c] sm:$0x3]
        %vm237 = vcmask 1042432
        %vm238 = vcmask 1046532
        %vm239 = vmor %vm237, %vm238
        %v240 = vrot.slane %v189, 5
        %v241 = vrot.slane %v240, 4
        %v242 = vrot.slane %v190, 5
        %v243 = vsel %vm239, %v241, %v242
        %v244 = vrot.slane %v242, 4
        %v245 = vrot.slane %v191, 5
        %v246 = vsel %vm239, %v244, %v245
        %v247 = vrot.slane %v192, 5
        %v248 = vrot.slane %v247, 4
        %v249 = vrot.slane %v193, 5
        %v250 = vsel %vm239, %v248, %v249
        %v251 = vrot.slane %v249, 4
        %v252 = vrot.slane %v194, 5
        %v253 = vsel %vm239, %v251, %v252
        %v254 = vrot.slane %v195, 5
        %v255 = vrot.slane %v254, 4
        %v256 = vrot.slane %v196, 5
        %v257 = vsel %vm239, %v255, %v256
        %v258 = vrot.slane %v256, 4
        %v259 = vrot.slane %v197, 5
        %v260 = vsel %vm239, %v258, %v259
        %v261 = vrot.slane %v198, 5
        %v262 = vrot.slane %v261, 4
        %v263 = vrot.slane %v199, 5
        %v264 = vsel %vm239, %v262, %v263
        %v265 = vrot.slane %v263, 4
        %v266 = vrot.slane %v200, 5
        %v267 = vsel %vm239, %v265, %v266
        %v268 = vrot.slane %v201, 5
        %v269 = vrot.slane %v268, 4
        %v270 = vrot.slane %v202, 5
        %v271 = vsel %vm239, %v269, %v270
        %v272 = vrot.slane %v270, 4
        %v273 = vrot.slane %v203, 5
        %v274 = vsel %vm239, %v272, %v273
        %v275 = vrot.slane %v204, 5
        %v276 = vrot.slane %v275, 4
        %v277 = vrot.slane %v205, 5
        %v278 = vsel %vm239, %v276, %v277
        %v279 = vrot.slane %v277, 4
        %v280 = vrot.slane %v206, 5
        %v281 = vsel %vm239, %v279, %v280
        %v282 = vrot.slane %v207, 5
        %v283 = vrot.slane %v282, 4
        %v284 = vrot.slane %v208, 5
        %v285 = vsel %vm239, %v283, %v284
        %v286 = vrot.slane %v284, 4
        %v287 = vrot.slane %v209, 5
        %v288 = vsel %vm239, %v286, %v287
        %v289 = vrot.slane %v210, 5
        %v290 = vrot.slane %v289, 4
        %v291 = vrot.slane %v211, 5
        %v292 = vsel %vm239, %v290, %v291
        %v293 = vrot.slane %v291, 4
        %v294 = vrot.slane %v212, 5
        %v295 = vsel %vm239, %v293, %v294
        %vm296 = vcmask 1041408
        %vm297 = vcmask 1045508
        %vm298 = vmor %vm296, %vm297
        %v299 = vrot.slane %v189, 6
        %v300 = vrot.slane %v299, 4
        %v301 = vrot.slane %v190, 6
        %v302 = vsel %vm298, %v300, %v301
        %v303 = vrot.slane %v301, 4
        %v304 = vrot.slane %v191, 6
        %v305 = vsel %vm298, %v303, %v304
        %v306 = vrot.slane %v192, 6
        %v307 = vrot.slane %v306, 4
        %v308 = vrot.slane %v193, 6
        %v309 = vsel %vm298, %v307, %v308
        %v310 = vrot.slane %v308, 4
        %v311 = vrot.slane %v194, 6
        %v312 = vsel %vm298, %v310, %v311
        %v313 = vrot.slane %v195, 6
        %v314 = vrot.slane %v313, 4
        %v315 = vrot.slane %v196, 6
        %v316 = vsel %vm298, %v314, %v315
        %v317 = vrot.slane %v315, 4
        %v318 = vrot.slane %v197, 6
        %v319 = vsel %vm298, %v317, %v318
        %v320 = vrot.slane %v198, 6
        %v321 = vrot.slane %v320, 4
        %v322 = vrot.slane %v199, 6
        %v323 = vsel %vm298, %v321, %v322
        %v324 = vrot.slane %v322, 4
        %v325 = vrot.slane %v200, 6
        %v326 = vsel %vm298, %v324, %v325
        %v327 = vrot.slane %v201, 6
        %v328 = vrot.slane %v327, 4
        %v329 = vrot.slane %v202, 6
        %v330 = vsel %vm298, %v328, %v329
        %v331 = vrot.slane %v329, 4
        %v332 = vrot.slane %v203, 6
        %v333 = vsel %vm298, %v331, %v332
        %v334 = vrot.slane %v204, 6
        %v335 = vrot.slane %v334, 4
        %v336 = vrot.slane %v205, 6
        %v337 = vsel %vm298, %v335, %v336
        %v338 = vrot.slane %v336, 4
        %v339 = vrot.slane %v206, 6
        %v340 = vsel %vm298, %v338, %v339
        %v341 = vrot.slane %v207, 6
        %v342 = vrot.slane %v341, 4
        %v343 = vrot.slane %v208, 6
        %v344 = vsel %vm298, %v342, %v343
        %v345 = vrot.slane %v343, 4
        %v346 = vrot.slane %v209, 6
        %v347 = vsel %vm298, %v345, %v346
        %v348 = vrot.slane %v210, 6
        %v349 = vrot.slane %v348, 4
        %v350 = vrot.slane %v211, 6
        %v351 = vsel %vm298, %v349, %v350
        %v352 = vrot.slane %v350, 4
        %v353 = vrot.slane %v212, 6
        %v354 = vsel %vm298, %v352, %v353
        %s355 = sadd.s32 %s185, 2
        %s356 = smul.u32 %s355, 3
        %s357 = smul.addr %s356, 4
        %s358 = scalar_lea.vmem %s182, %s357
        %v359 = vld [vmem:[%s358] sm:$0xf]
        %v360 = vld [vmem:[%s358 + $0x4] sm:$0xf]
        %v361 = vld [vmem:[%s358 + $0x8] sm:$0x3]
        %v362 = vld [vmem:[%s358 + $0xc] sm:$0xf]
        %v363 = vld [vmem:[%s358 + $0x10] sm:$0xf]
        %v364 = vld [vmem:[%s358 + $0x14] sm:$0x3]
        %v365 = vld [vmem:[%s358 + $0x18] sm:$0xf]
        %v366 = vld [vmem:[%s358 + $0x1c] sm:$0xf]
        %v367 = vld [vmem:[%s358 + $0x20] sm:$0x3]
        %v368 = vld [vmem:[%s358 + $0x24] sm:$0xf]
        %v369 = vld [vmem:[%s358 + $0x28] sm:$0xf]
        %v370 = vld [vmem:[%s358 + $0x2c] sm:$0x3]
        %v371 = vld [vmem:[%s358 + $0x30] sm:$0xf]
        %v372 = vld [vmem:[%s358 + $0x34] sm:$0xf]
        %v373 = vld [vmem:[%s358 + $0x38] sm:$0x3]
        %v374 = vld [vmem:[%s358 + $0x3c] sm:$0xf]
        %v375 = vld [vmem:[%s358 + $0x40] sm:$0xf]
        %v376 = vld [vmem:[%s358 + $0x44] sm:$0x3]
        %v377 = vld [vmem:[%s358 + $0x48] sm:$0xf]
        %v378 = vld [vmem:[%s358 + $0x4c] sm:$0xf]
        %v379 = vld [vmem:[%s358 + $0x50] sm:$0x3]
        %v380 = vld [vmem:[%s358 + $0x54] sm:$0xf]
        %v381 = vld [vmem:[%s358 + $0x58] sm:$0xf]
        %v382 = vld [vmem:[%s358 + $0x5c] sm:$0x3]
        %v407 = vrot.slane %v359, 5
        %v408 = vrot.slane %v407, 4
        %v409 = vrot.slane %v360, 5
        %v410 = vsel %vm239, %v408, %v409
        %v411 = vrot.slane %v409, 4
        %v412 = vrot.slane %v361, 5
        %v413 = vsel %vm239, %v411, %v412
        %v414 = vrot.slane %v362, 5
        %v415 = vrot.slane %v414, 4
        %v416 = vrot.slane %v363, 5
        %v417 = vsel %vm239, %v415, %v416
        %v418 = vrot.slane %v416, 4
        %v419 = vrot.slane %v364, 5
        %v420 = vsel %vm239, %v418, %v419
        %v421 = vrot.slane %v365, 5
        %v422 = vrot.slane %v421, 4
        %v423 = vrot.slane %v366, 5
        %v424 = vsel %vm239, %v422, %v423
        %v425 = vrot.slane %v423, 4
        %v426 = vrot.slane %v367, 5
        %v427 = vsel %vm239, %v425, %v426
        %v428 = vrot.slane %v368, 5
        %v429 = vrot.slane %v428, 4
        %v430 = vrot.slane %v369, 5
        %v431 = vsel %vm239, %v429, %v430
        %v432 = vrot.slane %v430, 4
        %v433 = vrot.slane %v370, 5
        %v434 = vsel %vm239, %v432, %v433
        %v435 = vrot.slane %v371, 5
        %v436 = vrot.slane %v435, 4
        %v437 = vrot.slane %v372, 5
        %v438 = vsel %vm239, %v436, %v437
        %v439 = vrot.slane %v437, 4
        %v440 = vrot.slane %v373, 5
        %v441 = vsel %vm239, %v439, %v440
        %v442 = vrot.slane %v374, 5
        %v443 = vrot.slane %v442, 4
        %v444 = vrot.slane %v375, 5
        %v445 = vsel %vm239, %v443, %v444
        %v446 = vrot.slane %v444, 4
        %v447 = vrot.slane %v376, 5
        %v448 = vsel %vm239, %v446, %v447
        %v449 = vrot.slane %v377, 5
        %v450 = vrot.slane %v449, 4
        %v451 = vrot.slane %v378, 5
        %v452 = vsel %vm239, %v450, %v451
        %v453 = vrot.slane %v451, 4
        %v454 = vrot.slane %v379, 5
        %v455 = vsel %vm239, %v453, %v454
        %v456 = vrot.slane %v380, 5
        %v457 = vrot.slane %v456, 4
        %v458 = vrot.slane %v381, 5
        %v459 = vsel %vm239, %v457, %v458
        %v460 = vrot.slane %v458, 4
        %v461 = vrot.slane %v382, 5
        %v462 = vsel %vm239, %v460, %v461
        %v463 = vrot.slane %v359, 6
        %v464 = vrot.slane %v463, 4
        %v465 = vrot.slane %v360, 6
        %v466 = vsel %vm298, %v464, %v465
        %v467 = vrot.slane %v465, 4
        %v468 = vrot.slane %v361, 6
        %v469 = vsel %vm298, %v467, %v468
        %v470 = vrot.slane %v362, 6
        %v471 = vrot.slane %v470, 4
        %v472 = vrot.slane %v363, 6
        %v473 = vsel %vm298, %v471, %v472
        %v474 = vrot.slane %v472, 4
        %v475 = vrot.slane %v364, 6
        %v476 = vsel %vm298, %v474, %v475
        %v477 = vrot.slane %v365, 6
        %v478 = vrot.slane %v477, 4
        %v479 = vrot.slane %v366, 6
        %v480 = vsel %vm298, %v478, %v479
        %v481 = vrot.slane %v479, 4
        %v482 = vrot.slane %v367, 6
        %v483 = vsel %vm298, %v481, %v482
        %v484 = vrot.slane %v368, 6
        %v485 = vrot.slane %v484, 4
        %v486 = vrot.slane %v369, 6
        %v487 = vsel %vm298, %v485, %v486
        %v488 = vrot.slane %v486, 4
        %v489 = vrot.slane %v370, 6
        %v490 = vsel %vm298, %v488, %v489
        %v491 = vrot.slane %v371, 6
        %v492 = vrot.slane %v491, 4
        %v493 = vrot.slane %v372, 6
        %v494 = vsel %vm298, %v492, %v493
        %v495 = vrot.slane %v493, 4
        %v496 = vrot.slane %v373, 6
        %v497 = vsel %vm298, %v495, %v496
        %v498 = vrot.slane %v374, 6
        %v499 = vrot.slane %v498, 4
        %v500 = vrot.slane %v375, 6
        %v501 = vsel %vm298, %v499, %v500
        %v502 = vrot.slane %v500, 4
        %v503 = vrot.slane %v376, 6
        %v504 = vsel %vm298, %v502, %v503
        %v505 = vrot.slane %v377, 6
        %v506 = vrot.slane %v505, 4
        %v507 = vrot.slane %v378, 6
        %v508 = vsel %vm298, %v506, %v507
        %v509 = vrot.slane %v507, 4
        %v510 = vrot.slane %v379, 6
        %v511 = vsel %vm298, %v509, %v510
        %v512 = vrot.slane %v380, 6
        %v513 = vrot.slane %v512, 4
        %v514 = vrot.slane %v381, 6
        %v515 = vsel %vm298, %v513, %v514
        %v516 = vrot.slane %v514, 4
        %v517 = vrot.slane %v382, 6
        %v518 = vsel %vm298, %v516, %v517
        %s519 = sadd.s32 %s185, 4
        %s520 = smul.u32 %s519, 3
        %s521 = smul.addr %s520, 4
        %s522 = scalar_lea.vmem %s182, %s521
        %v523 = vld [vmem:[%s522] sm:$0xf]
        %v524 = vld [vmem:[%s522 + $0x4] sm:$0xf]
        %v525 = vld [vmem:[%s522 + $0x8] sm:$0x3]
        %v526 = vld [vmem:[%s522 + $0xc] sm:$0xf]
        %v527 = vld [vmem:[%s522 + $0x10] sm:$0xf]
        %v528 = vld [vmem:[%s522 + $0x14] sm:$0x3]
        %v529 = vld [vmem:[%s522 + $0x18] sm:$0xf]
        %v530 = vld [vmem:[%s522 + $0x1c] sm:$0xf]
        %v531 = vld [vmem:[%s522 + $0x20] sm:$0x3]
        %v532 = vld [vmem:[%s522 + $0x24] sm:$0xf]
        %v533 = vld [vmem:[%s522 + $0x28] sm:$0xf]
        %v534 = vld [vmem:[%s522 + $0x2c] sm:$0x3]
        %v535 = vld [vmem:[%s522 + $0x30] sm:$0xf]
        %v536 = vld [vmem:[%s522 + $0x34] sm:$0xf]
        %v537 = vld [vmem:[%s522 + $0x38] sm:$0x3]
        %v538 = vld [vmem:[%s522 + $0x3c] sm:$0xf]
        %v539 = vld [vmem:[%s522 + $0x40] sm:$0xf]
        %v540 = vld [vmem:[%s522 + $0x44] sm:$0x3]
        %v541 = vld [vmem:[%s522 + $0x48] sm:$0xf]
        %v542 = vld [vmem:[%s522 + $0x4c] sm:$0xf]
        %v543 = vld [vmem:[%s522 + $0x50] sm:$0x3]
        %v544 = vld [vmem:[%s522 + $0x54] sm:$0xf]
        %v545 = vld [vmem:[%s522 + $0x58] sm:$0xf]
        %v546 = vld [vmem:[%s522 + $0x5c] sm:$0x3]
        %v571 = vrot.slane %v523, 5
        %v572 = vrot.slane %v571, 4
        %v573 = vrot.slane %v524, 5
        %v574 = vsel %vm239, %v572, %v573
        %v575 = vrot.slane %v573, 4
        %v576 = vrot.slane %v525, 5
        %v577 = vsel %vm239, %v575, %v576
        %v578 = vrot.slane %v526, 5
        %v579 = vrot.slane %v578, 4
        %v580 = vrot.slane %v527, 5
        %v581 = vsel %vm239, %v579, %v580
        %v582 = vrot.slane %v580, 4
        %v583 = vrot.slane %v528, 5
        %v584 = vsel %vm239, %v582, %v583
        %v585 = vrot.slane %v529, 5
        %v586 = vrot.slane %v585, 4
        %v587 = vrot.slane %v530, 5
        %v588 = vsel %vm239, %v586, %v587
        %v589 = vrot.slane %v587, 4
        %v590 = vrot.slane %v531, 5
        %v591 = vsel %vm239, %v589, %v590
        %v592 = vrot.slane %v532, 5
        %v593 = vrot.slane %v592, 4
        %v594 = vrot.slane %v533, 5
        %v595 = vsel %vm239, %v593, %v594
        %v596 = vrot.slane %v594, 4
        %v597 = vrot.slane %v534, 5
        %v598 = vsel %vm239, %v596, %v597
        %v599 = vrot.slane %v535, 5
        %v600 = vrot.slane %v599, 4
        %v601 = vrot.slane %v536, 5
        %v602 = vsel %vm239, %v600, %v601
        %v603 = vrot.slane %v601, 4
        %v604 = vrot.slane %v537, 5
        %v605 = vsel %vm239, %v603, %v604
        %v606 = vrot.slane %v538, 5
        %v607 = vrot.slane %v606, 4
        %v608 = vrot.slane %v539, 5
        %v609 = vsel %vm239, %v607, %v608
        %v610 = vrot.slane %v608, 4
        %v611 = vrot.slane %v540, 5
        %v612 = vsel %vm239, %v610, %v611
        %v613 = vrot.slane %v541, 5
        %v614 = vrot.slane %v613, 4
        %v615 = vrot.slane %v542, 5
        %v616 = vsel %vm239, %v614, %v615
        %v617 = vrot.slane %v615, 4
        %v618 = vrot.slane %v543, 5
        %v619 = vsel %vm239, %v617, %v618
        %v620 = vrot.slane %v544, 5
        %v621 = vrot.slane %v620, 4
        %v622 = vrot.slane %v545, 5
        %v623 = vsel %vm239, %v621, %v622
        %v624 = vrot.slane %v622, 4
        %v625 = vrot.slane %v546, 5
        %v626 = vsel %vm239, %v624, %v625
        %v627 = vrot.slane %v523, 6
        %v628 = vrot.slane %v627, 4
        %v629 = vrot.slane %v524, 6
        %v630 = vsel %vm298, %v628, %v629
        %v631 = vrot.slane %v629, 4
        %v632 = vrot.slane %v525, 6
        %v633 = vsel %vm298, %v631, %v632
        %v634 = vrot.slane %v526, 6
        %v635 = vrot.slane %v634, 4
        %v636 = vrot.slane %v527, 6
        %v637 = vsel %vm298, %v635, %v636
        %v638 = vrot.slane %v636, 4
        %v639 = vrot.slane %v528, 6
        %v640 = vsel %vm298, %v638, %v639
        %v641 = vrot.slane %v529, 6
        %v642 = vrot.slane %v641, 4
        %v643 = vrot.slane %v530, 6
        %v644 = vsel %vm298, %v642, %v643
        %v645 = vrot.slane %v643, 4
        %v646 = vrot.slane %v531, 6
        %v647 = vsel %vm298, %v645, %v646
        %v648 = vrot.slane %v532, 6
        %v649 = vrot.slane %v648, 4
        %v650 = vrot.slane %v533, 6
        %v651 = vsel %vm298, %v649, %v650
        %v652 = vrot.slane %v650, 4
        %v653 = vrot.slane %v534, 6
        %v654 = vsel %vm298, %v652, %v653
        %v655 = vrot.slane %v535, 6
        %v656 = vrot.slane %v655, 4
        %v657 = vrot.slane %v536, 6
        %v658 = vsel %vm298, %v656, %v657
        %v659 = vrot.slane %v657, 4
        %v660 = vrot.slane %v537, 6
        %v661 = vsel %vm298, %v659, %v660
        %v662 = vrot.slane %v538, 6
        %v663 = vrot.slane %v662, 4
        %v664 = vrot.slane %v539, 6
        %v665 = vsel %vm298, %v663, %v664
        %v666 = vrot.slane %v664, 4
        %v667 = vrot.slane %v540, 6
        %v668 = vsel %vm298, %v666, %v667
        %v669 = vrot.slane %v541, 6
        %v670 = vrot.slane %v669, 4
        %v671 = vrot.slane %v542, 6
        %v672 = vsel %vm298, %v670, %v671
        %v673 = vrot.slane %v671, 4
        %v674 = vrot.slane %v543, 6
        %v675 = vsel %vm298, %v673, %v674
        %v676 = vrot.slane %v544, 6
        %v677 = vrot.slane %v676, 4
        %v678 = vrot.slane %v545, 6
        %v679 = vsel %vm298, %v677, %v678
        %v680 = vrot.slane %v678, 4
        %v681 = vrot.slane %v546, 6
        %v682 = vsel %vm298, %v680, %v681
        %v683 = vunpack.c.l.b16 %v189
        %v684 = vunpack.c.l.b16 %v190
        %v685 = vunpack.c.l.b16 %v192
        %v686 = vunpack.c.l.b16 %v193
        %v687 = vunpack.c.l.b16 %v195
        %v688 = vunpack.c.l.b16 %v196
        %v689 = vunpack.c.l.b16 %v198
        %v690 = vunpack.c.l.b16 %v199
        %v691 = vunpack.c.l.b16 %v201
        %v692 = vunpack.c.l.b16 %v202
        %v693 = vunpack.c.l.b16 %v204
        %v694 = vunpack.c.l.b16 %v205
        %v695 = vunpack.c.l.b16 %v207
        %v696 = vunpack.c.l.b16 %v208
        %v697 = vunpack.c.l.b16 %v210
        %v698 = vunpack.c.l.b16 %v211
        %v699 = vpack.c.b16 %v684, %v683
        %v700 = vpack.c.b16 %v686, %v685
        %v701 = vpack.c.b16 %v688, %v687
        %v702 = vpack.c.b16 %v690, %v689
        %v703 = vpack.c.b16 %v692, %v691
        %v704 = vpack.c.b16 %v694, %v693
        %v705 = vpack.c.b16 %v696, %v695
        %v706 = vpack.c.b16 %v698, %v697
        %v715 = vunpack.c.l.b16 %v243
        %v716 = vunpack.c.l.b16 %v246
        %v717 = vunpack.c.l.b16 %v250
        %v718 = vunpack.c.l.b16 %v253
        %v719 = vunpack.c.l.b16 %v257
        %v720 = vunpack.c.l.b16 %v260
        %v721 = vunpack.c.l.b16 %v264
        %v722 = vunpack.c.l.b16 %v267
        %v723 = vunpack.c.l.b16 %v271
        %v724 = vunpack.c.l.b16 %v274
        %v725 = vunpack.c.l.b16 %v278
        %v726 = vunpack.c.l.b16 %v281
        %v727 = vunpack.c.l.b16 %v285
        %v728 = vunpack.c.l.b16 %v288
        %v729 = vunpack.c.l.b16 %v292
        %v730 = vunpack.c.l.b16 %v295
        %v731 = vpack.c.b16 %v716, %v715
        %v732 = vpack.c.b16 %v718, %v717
        %v733 = vpack.c.b16 %v720, %v719
        %v734 = vpack.c.b16 %v722, %v721
        %v735 = vpack.c.b16 %v724, %v723
        %v736 = vpack.c.b16 %v726, %v725
        %v737 = vpack.c.b16 %v728, %v727
        %v738 = vpack.c.b16 %v730, %v729
        %v747 = vunpack.c.l.b16 %v302
        %v748 = vunpack.c.l.b16 %v305
        %v749 = vunpack.c.l.b16 %v309
        %v750 = vunpack.c.l.b16 %v312
        %v751 = vunpack.c.l.b16 %v316
        %v752 = vunpack.c.l.b16 %v319
        %v753 = vunpack.c.l.b16 %v323
        %v754 = vunpack.c.l.b16 %v326
        %v755 = vunpack.c.l.b16 %v330
        %v756 = vunpack.c.l.b16 %v333
        %v757 = vunpack.c.l.b16 %v337
        %v758 = vunpack.c.l.b16 %v340
        %v759 = vunpack.c.l.b16 %v344
        %v760 = vunpack.c.l.b16 %v347
        %v761 = vunpack.c.l.b16 %v351
        %v762 = vunpack.c.l.b16 %v354
        %v763 = vpack.c.b16 %v748, %v747
        %v764 = vpack.c.b16 %v750, %v749
        %v765 = vpack.c.b16 %v752, %v751
        %v766 = vpack.c.b16 %v754, %v753
        %v767 = vpack.c.b16 %v756, %v755
        %v768 = vpack.c.b16 %v758, %v757
        %v769 = vpack.c.b16 %v760, %v759
        %v770 = vpack.c.b16 %v762, %v761
        %v779 = vunpack.c.l.b16 %v359
        %v780 = vunpack.c.l.b16 %v360
        %v781 = vunpack.c.l.b16 %v362
        %v782 = vunpack.c.l.b16 %v363
        %v783 = vunpack.c.l.b16 %v365
        %v784 = vunpack.c.l.b16 %v366
        %v785 = vunpack.c.l.b16 %v368
        %v786 = vunpack.c.l.b16 %v369
        %v787 = vunpack.c.l.b16 %v371
        %v788 = vunpack.c.l.b16 %v372
        %v789 = vunpack.c.l.b16 %v374
        %v790 = vunpack.c.l.b16 %v375
        %v791 = vunpack.c.l.b16 %v377
        %v792 = vunpack.c.l.b16 %v378
        %v793 = vunpack.c.l.b16 %v380
        %v794 = vunpack.c.l.b16 %v381
        %v795 = vpack.c.b16 %v780, %v779
        %v796 = vpack.c.b16 %v782, %v781
        %v797 = vpack.c.b16 %v784, %v783
        %v798 = vpack.c.b16 %v786, %v785
        %v799 = vpack.c.b16 %v788, %v787
        %v800 = vpack.c.b16 %v790, %v789
        %v801 = vpack.c.b16 %v792, %v791
        %v802 = vpack.c.b16 %v794, %v793
        %v811 = vunpack.c.l.b16 %v410
        %v812 = vunpack.c.l.b16 %v413
        %v813 = vunpack.c.l.b16 %v417
        %v814 = vunpack.c.l.b16 %v420
        %v815 = vunpack.c.l.b16 %v424
        %v816 = vunpack.c.l.b16 %v427
        %v817 = vunpack.c.l.b16 %v431
        %v818 = vunpack.c.l.b16 %v434
        %v819 = vunpack.c.l.b16 %v438
        %v820 = vunpack.c.l.b16 %v441
        %v821 = vunpack.c.l.b16 %v445
        %v822 = vunpack.c.l.b16 %v448
        %v823 = vunpack.c.l.b16 %v452
        %v824 = vunpack.c.l.b16 %v455
        %v825 = vunpack.c.l.b16 %v459
        %v826 = vunpack.c.l.b16 %v462
        %v827 = vpack.c.b16 %v812, %v811
        %v828 = vpack.c.b16 %v814, %v813
        %v829 = vpack.c.b16 %v816, %v815
        %v830 = vpack.c.b16 %v818, %v817
        %v831 = vpack.c.b16 %v820, %v819
        %v832 = vpack.c.b16 %v822, %v821
        %v833 = vpack.c.b16 %v824, %v823
        %v834 = vpack.c.b16 %v826, %v825
        %v843 = vunpack.c.l.b16 %v466
        %v844 = vunpack.c.l.b16 %v469
        %v845 = vunpack.c.l.b16 %v473
        %v846 = vunpack.c.l.b16 %v476
        %v847 = vunpack.c.l.b16 %v480
        %v848 = vunpack.c.l.b16 %v483
        %v849 = vunpack.c.l.b16 %v487
        %v850 = vunpack.c.l.b16 %v490
        %v851 = vunpack.c.l.b16 %v494
        %v852 = vunpack.c.l.b16 %v497
        %v853 = vunpack.c.l.b16 %v501
        %v854 = vunpack.c.l.b16 %v504
        %v855 = vunpack.c.l.b16 %v508
        %v856 = vunpack.c.l.b16 %v511
        %v857 = vunpack.c.l.b16 %v515
        %v858 = vunpack.c.l.b16 %v518
        %v859 = vpack.c.b16 %v844, %v843
        %v860 = vpack.c.b16 %v846, %v845
        %v861 = vpack.c.b16 %v848, %v847
        %v862 = vpack.c.b16 %v850, %v849
        %v863 = vpack.c.b16 %v852, %v851
        %v864 = vpack.c.b16 %v854, %v853
        %v865 = vpack.c.b16 %v856, %v855
        %v866 = vpack.c.b16 %v858, %v857
        %v875 = vunpack.c.l.b16 %v523
        %v876 = vunpack.c.l.b16 %v524
        %v877 = vunpack.c.l.b16 %v526
        %v878 = vunpack.c.l.b16 %v527
        %v879 = vunpack.c.l.b16 %v529
        %v880 = vunpack.c.l.b16 %v530
        %v881 = vunpack.c.l.b16 %v532
        %v882 = vunpack.c.l.b16 %v533
        %v883 = vunpack.c.l.b16 %v535
        %v884 = vunpack.c.l.b16 %v536
        %v885 = vunpack.c.l.b16 %v538
        %v886 = vunpack.c.l.b16 %v539
        %v887 = vunpack.c.l.b16 %v541
        %v888 = vunpack.c.l.b16 %v542
        %v889 = vunpack.c.l.b16 %v544
        %v890 = vunpack.c.l.b16 %v545
        %v891 = vpack.c.b16 %v876, %v875
        %v892 = vpack.c.b16 %v878, %v877
        %v893 = vpack.c.b16 %v880, %v879
        %v894 = vpack.c.b16 %v882, %v881
        %v895 = vpack.c.b16 %v884, %v883
        %v896 = vpack.c.b16 %v886, %v885
        %v897 = vpack.c.b16 %v888, %v887
        %v898 = vpack.c.b16 %v890, %v889
        %v907 = vunpack.c.l.b16 %v574
        %v908 = vunpack.c.l.b16 %v577
        %v909 = vunpack.c.l.b16 %v581
        %v910 = vunpack.c.l.b16 %v584
        %v911 = vunpack.c.l.b16 %v588
        %v912 = vunpack.c.l.b16 %v591
        %v913 = vunpack.c.l.b16 %v595
        %v914 = vunpack.c.l.b16 %v598
        %v915 = vunpack.c.l.b16 %v602
        %v916 = vunpack.c.l.b16 %v605
        %v917 = vunpack.c.l.b16 %v609
        %v918 = vunpack.c.l.b16 %v612
        %v919 = vunpack.c.l.b16 %v616
        %v920 = vunpack.c.l.b16 %v619
        %v921 = vunpack.c.l.b16 %v623
        %v922 = vunpack.c.l.b16 %v626
        %v923 = vpack.c.b16 %v908, %v907
        %v924 = vpack.c.b16 %v910, %v909
        %v925 = vpack.c.b16 %v912, %v911
        %v926 = vpack.c.b16 %v914, %v913
        %v927 = vpack.c.b16 %v916, %v915
        %v928 = vpack.c.b16 %v918, %v917
        %v929 = vpack.c.b16 %v920, %v919
        %v930 = vpack.c.b16 %v922, %v921
        %v939 = vunpack.c.l.b16 %v630
        %v940 = vunpack.c.l.b16 %v633
        %v941 = vunpack.c.l.b16 %v637
        %v942 = vunpack.c.l.b16 %v640
        %v943 = vunpack.c.l.b16 %v644
        %v944 = vunpack.c.l.b16 %v647
        %v945 = vunpack.c.l.b16 %v651
        %v946 = vunpack.c.l.b16 %v654
        %v947 = vunpack.c.l.b16 %v658
        %v948 = vunpack.c.l.b16 %v661
        %v949 = vunpack.c.l.b16 %v665
        %v950 = vunpack.c.l.b16 %v668
        %v951 = vunpack.c.l.b16 %v672
        %v952 = vunpack.c.l.b16 %v675
        %v953 = vunpack.c.l.b16 %v679
        %v954 = vunpack.c.l.b16 %v682
        %v955 = vpack.c.b16 %v940, %v939
        %v956 = vpack.c.b16 %v942, %v941
        %v957 = vpack.c.b16 %v944, %v943
        %v958 = vpack.c.b16 %v946, %v945
        %v959 = vpack.c.b16 %v948, %v947
        %v960 = vpack.c.b16 %v950, %v949
        %v961 = vpack.c.b16 %v952, %v951
        %v962 = vpack.c.b16 %v954, %v953
        %v971 = vld [vmem:[%s1] sm:$0xf]
        %v972 = vld [vmem:[%s1 + $0x4] sm:$0xf]
        %v973 = vld [vmem:[%s1 + $0x8] sm:$0xf]
        %v974 = vld [vmem:[%s1 + $0xc] sm:$0xf]
        %v975 = vld [vmem:[%s1 + $0x10] sm:$0xf]
        %v976 = vld [vmem:[%s1 + $0x14] sm:$0xf]
        %v977 = vld [vmem:[%s1 + $0x18] sm:$0xf]
        %v978 = vld [vmem:[%s1 + $0x1c] sm:$0xf]
        %v979 = vld [vmem:[%s1 + $0x20] sm:$0xf]
        %v980 = vld [vmem:[%s1 + $0x24] sm:$0xf]
        %v981 = vld [vmem:[%s1 + $0x28] sm:$0xf]
        %v982 = vld [vmem:[%s1 + $0x2c] sm:$0xf]
        %v983 = vld [vmem:[%s1 + $0x30] sm:$0xf]
        %v984 = vld [vmem:[%s1 + $0x34] sm:$0xf]
        %v985 = vld [vmem:[%s1 + $0x38] sm:$0xf]
        %v986 = vld [vmem:[%s1 + $0x3c] sm:$0xf]
        %v987 = vld [vmem:[%s1 + $0x40] sm:$0xf]
        %v988 = vld [vmem:[%s1 + $0x44] sm:$0xf]
        %v989 = vld [vmem:[%s1 + $0x48] sm:$0xf]
        %v990 = vld [vmem:[%s1 + $0x4c] sm:$0xf]
        %v991 = vld [vmem:[%s1 + $0x50] sm:$0xf]
        %v992 = vld [vmem:[%s1 + $0x54] sm:$0xf]
        %v993 = vld [vmem:[%s1 + $0x58] sm:$0xf]
        %v994 = vld [vmem:[%s1 + $0x5c] sm:$0xf]
        %v995 = vld [vmem:[%s1 + $0x60] sm:$0xf]
        %v996 = vld [vmem:[%s1 + $0x64] sm:$0xf]
        %v997 = vld [vmem:[%s1 + $0x68] sm:$0xf]
        %v998 = vld [vmem:[%s1 + $0x6c] sm:$0xf]
        %v999 = vld [vmem:[%s1 + $0x70] sm:$0xf]
        %v1000 = vld [vmem:[%s1 + $0x74] sm:$0xf]
        %v1001 = vld [vmem:[%s1 + $0x78] sm:$0xf]
        %v1002 = vld [vmem:[%s1 + $0x7c] sm:$0xf]
        %v1003 = vld [vmem:[%s1 + $0x80] sm:$0xf]
        %v1004 = vld [vmem:[%s1 + $0x84] sm:$0xf]
        %v1005 = vld [vmem:[%s1 + $0x88] sm:$0xf]
        %v1006 = vld [vmem:[%s1 + $0x8c] sm:$0xf]
        %v1007 = vld [vmem:[%s1 + $0x90] sm:$0xf]
        %v1008 = vld [vmem:[%s1 + $0x94] sm:$0xf]
        %v1009 = vld [vmem:[%s1 + $0x98] sm:$0xf]
        %v1010 = vld [vmem:[%s1 + $0x9c] sm:$0xf]
        %v1011 = vld [vmem:[%s1 + $0xa0] sm:$0xf]
        %v1012 = vld [vmem:[%s1 + $0xa4] sm:$0xf]
        %v1013 = vld [vmem:[%s1 + $0xa8] sm:$0xf]
        %v1014 = vld [vmem:[%s1 + $0xac] sm:$0xf]
        %v1015 = vld [vmem:[%s1 + $0xb0] sm:$0xf]
        %v1016 = vld [vmem:[%s1 + $0xb4] sm:$0xf]
        %v1017 = vld [vmem:[%s1 + $0xb8] sm:$0xf]
        %v1018 = vld [vmem:[%s1 + $0xbc] sm:$0xf]
        %v1019 = vld [vmem:[%s1 + $0xc0] sm:$0xf]
        %v1020 = vld [vmem:[%s1 + $0xc4] sm:$0xf]
        %v1021 = vld [vmem:[%s1 + $0xc8] sm:$0xf]
        %v1022 = vld [vmem:[%s1 + $0xcc] sm:$0xf]
        %v1023 = vld [vmem:[%s1 + $0xd0] sm:$0xf]
        %v1024 = vld [vmem:[%s1 + $0xd4] sm:$0xf]
        %v1025 = vld [vmem:[%s1 + $0xd8] sm:$0xf]
        %v1026 = vld [vmem:[%s1 + $0xdc] sm:$0xf]
        %v1027 = vld [vmem:[%s1 + $0xe0] sm:$0xf]
        %v1028 = vld [vmem:[%s1 + $0xe4] sm:$0xf]
        %v1029 = vld [vmem:[%s1 + $0xe8] sm:$0xf]
        %v1030 = vld [vmem:[%s1 + $0xec] sm:$0xf]
        %v1031 = vld [vmem:[%s1 + $0xf0] sm:$0xf]
        %v1032 = vld [vmem:[%s1 + $0xf4] sm:$0xf]
        %v1033 = vld [vmem:[%s1 + $0xf8] sm:$0xf]
        %v1034 = vld [vmem:[%s1 + $0xfc] sm:$0xf]
        %v1035 = vld [vmem:[%s1 + $0x100] sm:$0xf]
        %v1036 = vld [vmem:[%s1 + $0x104] sm:$0xf]
        %v1037 = vld [vmem:[%s1 + $0x108] sm:$0xf]
        %v1038 = vld [vmem:[%s1 + $0x10c] sm:$0xf]
        %v1039 = vld [vmem:[%s1 + $0x110] sm:$0xf]
        %v1040 = vld [vmem:[%s1 + $0x114] sm:$0xf]
        %v1041 = vld [vmem:[%s1 + $0x118] sm:$0xf]
        %v1042 = vld [vmem:[%s1 + $0x11c] sm:$0xf]
        %v1043 = vld [vmem:[%s1 + $0x120] sm:$0xf]
        %v1044 = vld [vmem:[%s1 + $0x124] sm:$0xf]
        %v1045 = vld [vmem:[%s1 + $0x128] sm:$0xf]
        %v1046 = vld [vmem:[%s1 + $0x12c] sm:$0xf]
        %v1047 = vld [vmem:[%s1 + $0x130] sm:$0xf]
        %v1048 = vld [vmem:[%s1 + $0x134] sm:$0xf]
        %v1049 = vld [vmem:[%s1 + $0x138] sm:$0xf]
        %v1050 = vld [vmem:[%s1 + $0x13c] sm:$0xf]
        %v1051 = vld [vmem:[%s1 + $0x140] sm:$0xf]
        %v1052 = vld [vmem:[%s1 + $0x144] sm:$0xf]
        %v1053 = vld [vmem:[%s1 + $0x148] sm:$0xf]
        %v1054 = vld [vmem:[%s1 + $0x14c] sm:$0xf]
        %v1055 = vld [vmem:[%s1 + $0x150] sm:$0xf]
        %v1056 = vld [vmem:[%s1 + $0x154] sm:$0xf]
        %v1057 = vld [vmem:[%s1 + $0x158] sm:$0xf]
        %v1058 = vld [vmem:[%s1 + $0x15c] sm:$0xf]
        %v1059 = vld [vmem:[%s1 + $0x160] sm:$0xf]
        %v1060 = vld [vmem:[%s1 + $0x164] sm:$0xf]
        %v1061 = vld [vmem:[%s1 + $0x168] sm:$0xf]
        %v1062 = vld [vmem:[%s1 + $0x16c] sm:$0xf]
        %v1063 = vld [vmem:[%s1 + $0x170] sm:$0xf]
        %v1064 = vld [vmem:[%s1 + $0x174] sm:$0xf]
        %v1065 = vld [vmem:[%s1 + $0x178] sm:$0xf]
        %v1066 = vld [vmem:[%s1 + $0x17c] sm:$0xf]
        %v1067 = vld [vmem:[%s1 + $0x180] sm:$0xf]
        %v1068 = vld [vmem:[%s1 + $0x184] sm:$0xf]
        %v1069 = vld [vmem:[%s1 + $0x188] sm:$0xf]
        %v1070 = vld [vmem:[%s1 + $0x18c] sm:$0xf]
        %v1071 = vld [vmem:[%s1 + $0x190] sm:$0xf]
        %v1072 = vld [vmem:[%s1 + $0x194] sm:$0xf]
        %v1073 = vld [vmem:[%s1 + $0x198] sm:$0xf]
        %v1074 = vld [vmem:[%s1 + $0x19c] sm:$0xf]
        %v1075 = vld [vmem:[%s1 + $0x1a0] sm:$0xf]
        %v1076 = vld [vmem:[%s1 + $0x1a4] sm:$0xf]
        %v1077 = vld [vmem:[%s1 + $0x1a8] sm:$0xf]
        %v1078 = vld [vmem:[%s1 + $0x1ac] sm:$0xf]
        %v1079 = vld [vmem:[%s1 + $0x1b0] sm:$0xf]
        %v1080 = vld [vmem:[%s1 + $0x1b4] sm:$0xf]
        %v1081 = vld [vmem:[%s1 + $0x1b8] sm:$0xf]
        %v1082 = vld [vmem:[%s1 + $0x1bc] sm:$0xf]
        %v1083 = vld [vmem:[%s1 + $0x1c0] sm:$0xf]
        %v1084 = vld [vmem:[%s1 + $0x1c4] sm:$0xf]
        %v1085 = vld [vmem:[%s1 + $0x1c8] sm:$0xf]
        %v1086 = vld [vmem:[%s1 + $0x1cc] sm:$0xf]
        %v1087 = vld [vmem:[%s1 + $0x1d0] sm:$0xf]
        %v1088 = vld [vmem:[%s1 + $0x1d4] sm:$0xf]
        %v1089 = vld [vmem:[%s1 + $0x1d8] sm:$0xf]
        %v1090 = vld [vmem:[%s1 + $0x1dc] sm:$0xf]
        %v1091 = vld [vmem:[%s1 + $0x1e0] sm:$0xf]
        %v1092 = vld [vmem:[%s1 + $0x1e4] sm:$0xf]
        %v1093 = vld [vmem:[%s1 + $0x1e8] sm:$0xf]
        %v1094 = vld [vmem:[%s1 + $0x1ec] sm:$0xf]
        %v1095 = vld [vmem:[%s1 + $0x1f0] sm:$0xf]
        %v1096 = vld [vmem:[%s1 + $0x1f4] sm:$0xf]
        %v1097 = vld [vmem:[%s1 + $0x1f8] sm:$0xf]
        %v1098 = vld [vmem:[%s1 + $0x1fc] sm:$0xf]
        %v1099 = vld [vmem:[%s1 + $0x200] sm:$0xf]
        %v1100 = vld [vmem:[%s1 + $0x204] sm:$0xf]
        %v1101 = vld [vmem:[%s1 + $0x208] sm:$0xf]
        %v1102 = vld [vmem:[%s1 + $0x20c] sm:$0xf]
        %v1103 = vld [vmem:[%s1 + $0x210] sm:$0xf]
        %v1104 = vld [vmem:[%s1 + $0x214] sm:$0xf]
        %v1105 = vld [vmem:[%s1 + $0x218] sm:$0xf]
        %v1106 = vld [vmem:[%s1 + $0x21c] sm:$0xf]
        %v1107 = vld [vmem:[%s1 + $0x220] sm:$0xf]
        %v1108 = vld [vmem:[%s1 + $0x224] sm:$0xf]
        %v1109 = vld [vmem:[%s1 + $0x228] sm:$0xf]
        %v1110 = vld [vmem:[%s1 + $0x22c] sm:$0xf]
        %v1111 = vld [vmem:[%s1 + $0x230] sm:$0xf]
        %v1112 = vld [vmem:[%s1 + $0x234] sm:$0xf]
        %v1113 = vld [vmem:[%s1 + $0x238] sm:$0xf]
        %v1114 = vld [vmem:[%s1 + $0x23c] sm:$0xf]
        %v1115 = vld [vmem:[%s2] sm:$0x1]
        %v1117 = vlaneseq
        %v1118 = vshrl.u32 %v1117, 7
        %v1119 = vsub.s32 0, %v1118
        %v1120 = vrot.slane %v1115, %v1119
        %v1266 = vunpack.c.l.b16 %v971
        %v1267 = vunpack.c.l.b16 %v972
        %v1268 = vunpack.c.l.b16 %v973
        %v1269 = vunpack.c.l.b16 %v974
        %v1270 = vunpack.c.l.b16 %v975
        %v1271 = vunpack.c.l.b16 %v976
        %v1272 = vunpack.c.l.b16 %v977
        %v1273 = vunpack.c.l.b16 %v978
        %v1274 = vunpack.c.l.b16 %v979
        %v1275 = vunpack.c.l.b16 %v980
        %v1276 = vunpack.c.l.b16 %v981
        %v1277 = vunpack.c.l.b16 %v982
        %v1278 = vunpack.c.l.b16 %v983
        %v1279 = vunpack.c.l.b16 %v984
        %v1280 = vunpack.c.l.b16 %v985
        %v1281 = vunpack.c.l.b16 %v986
        %v1282 = vunpack.c.l.b16 %v987
        %v1283 = vunpack.c.l.b16 %v988
        %v1284 = vunpack.c.l.b16 %v989
        %v1285 = vunpack.c.l.b16 %v990
        %v1286 = vunpack.c.l.b16 %v991
        %v1287 = vunpack.c.l.b16 %v992
        %v1288 = vunpack.c.l.b16 %v993
        %v1289 = vunpack.c.l.b16 %v994
        %v1290 = vunpack.c.l.b16 %v995
        %v1291 = vunpack.c.l.b16 %v996
        %v1292 = vunpack.c.l.b16 %v997
        %v1293 = vunpack.c.l.b16 %v998
        %v1294 = vunpack.c.l.b16 %v999
        %v1295 = vunpack.c.l.b16 %v1000
        %v1296 = vunpack.c.l.b16 %v1001
        %v1297 = vunpack.c.l.b16 %v1002
        %v1298 = vunpack.c.l.b16 %v1003
        %v1299 = vunpack.c.l.b16 %v1004
        %v1300 = vunpack.c.l.b16 %v1005
        %v1301 = vunpack.c.l.b16 %v1006
        %v1302 = vunpack.c.l.b16 %v1007
        %v1303 = vunpack.c.l.b16 %v1008
        %v1304 = vunpack.c.l.b16 %v1009
        %v1305 = vunpack.c.l.b16 %v1010
        %v1306 = vunpack.c.l.b16 %v1011
        %v1307 = vunpack.c.l.b16 %v1012
        %v1308 = vunpack.c.l.b16 %v1013
        %v1309 = vunpack.c.l.b16 %v1014
        %v1310 = vunpack.c.l.b16 %v1015
        %v1311 = vunpack.c.l.b16 %v1016
        %v1312 = vunpack.c.l.b16 %v1017
        %v1313 = vunpack.c.l.b16 %v1018
        %v1314 = vunpack.c.l.b16 %v1019
        %v1315 = vunpack.c.l.b16 %v1020
        %v1316 = vunpack.c.l.b16 %v1021
        %v1317 = vunpack.c.l.b16 %v1022
        %v1318 = vunpack.c.l.b16 %v1023
        %v1319 = vunpack.c.l.b16 %v1024
        %v1320 = vunpack.c.l.b16 %v1025
        %v1321 = vunpack.c.l.b16 %v1026
        %v1322 = vunpack.c.l.b16 %v1027
        %v1323 = vunpack.c.l.b16 %v1028
        %v1324 = vunpack.c.l.b16 %v1029
        %v1325 = vunpack.c.l.b16 %v1030
        %v1326 = vunpack.c.l.b16 %v1031
        %v1327 = vunpack.c.l.b16 %v1032
        %v1328 = vunpack.c.l.b16 %v1033
        %v1329 = vunpack.c.l.b16 %v1034
        %v1330 = vunpack.c.l.b16 %v1035
        %v1331 = vunpack.c.l.b16 %v1036
        %v1332 = vunpack.c.l.b16 %v1037
        %v1333 = vunpack.c.l.b16 %v1038
        %v1334 = vunpack.c.l.b16 %v1039
        %v1335 = vunpack.c.l.b16 %v1040
        %v1336 = vunpack.c.l.b16 %v1041
        %v1337 = vunpack.c.l.b16 %v1042
        %v1338 = vunpack.c.l.b16 %v1043
        %v1339 = vunpack.c.l.b16 %v1044
        %v1340 = vunpack.c.l.b16 %v1045
        %v1341 = vunpack.c.l.b16 %v1046
        %v1342 = vunpack.c.l.b16 %v1047
        %v1343 = vunpack.c.l.b16 %v1048
        %v1344 = vunpack.c.l.b16 %v1049
        %v1345 = vunpack.c.l.b16 %v1050
        %v1346 = vunpack.c.l.b16 %v1051
        %v1347 = vunpack.c.l.b16 %v1052
        %v1348 = vunpack.c.l.b16 %v1053
        %v1349 = vunpack.c.l.b16 %v1054
        %v1350 = vunpack.c.l.b16 %v1055
        %v1351 = vunpack.c.l.b16 %v1056
        %v1352 = vunpack.c.l.b16 %v1057
        %v1353 = vunpack.c.l.b16 %v1058
        %v1354 = vunpack.c.l.b16 %v1059
        %v1355 = vunpack.c.l.b16 %v1060
        %v1356 = vunpack.c.l.b16 %v1061
        %v1357 = vunpack.c.l.b16 %v1062
        %v1358 = vunpack.c.l.b16 %v1063
        %v1359 = vunpack.c.l.b16 %v1064
        %v1360 = vunpack.c.l.b16 %v1065
        %v1361 = vunpack.c.l.b16 %v1066
        %v1362 = vunpack.c.l.b16 %v1067
        %v1363 = vunpack.c.l.b16 %v1068
        %v1364 = vunpack.c.l.b16 %v1069
        %v1365 = vunpack.c.l.b16 %v1070
        %v1366 = vunpack.c.l.b16 %v1071
        %v1367 = vunpack.c.l.b16 %v1072
        %v1368 = vunpack.c.l.b16 %v1073
        %v1369 = vunpack.c.l.b16 %v1074
        %v1370 = vunpack.c.l.b16 %v1075
        %v1371 = vunpack.c.l.b16 %v1076
        %v1372 = vunpack.c.l.b16 %v1077
        %v1373 = vunpack.c.l.b16 %v1078
        %v1374 = vunpack.c.l.b16 %v1079
        %v1375 = vunpack.c.l.b16 %v1080
        %v1376 = vunpack.c.l.b16 %v1081
        %v1377 = vunpack.c.l.b16 %v1082
        %v1378 = vunpack.c.l.b16 %v1083
        %v1379 = vunpack.c.l.b16 %v1084
        %v1380 = vunpack.c.l.b16 %v1085
        %v1381 = vunpack.c.l.b16 %v1086
        %v1382 = vunpack.c.l.b16 %v1087
        %v1383 = vunpack.c.l.b16 %v1088
        %v1384 = vunpack.c.l.b16 %v1089
        %v1385 = vunpack.c.l.b16 %v1090
        %v1386 = vunpack.c.l.b16 %v1091
        %v1387 = vunpack.c.l.b16 %v1092
        %v1388 = vunpack.c.l.b16 %v1093
        %v1389 = vunpack.c.l.b16 %v1094
        %v1390 = vunpack.c.l.b16 %v1095
        %v1391 = vunpack.c.l.b16 %v1096
        %v1392 = vunpack.c.l.b16 %v1097
        %v1393 = vunpack.c.l.b16 %v1098
        %v1394 = vunpack.c.l.b16 %v1099
        %v1395 = vunpack.c.l.b16 %v1100
        %v1396 = vunpack.c.l.b16 %v1101
        %v1397 = vunpack.c.l.b16 %v1102
        %v1398 = vunpack.c.l.b16 %v1103
        %v1399 = vunpack.c.l.b16 %v1104
        %v1400 = vunpack.c.l.b16 %v1105
        %v1401 = vunpack.c.l.b16 %v1106
        %v1402 = vunpack.c.l.b16 %v1107
        %v1403 = vunpack.c.l.b16 %v1108
        %v1404 = vunpack.c.l.b16 %v1109
        %v1405 = vunpack.c.l.b16 %v1110
        %v1406 = vunpack.c.l.b16 %v1111
        %v1407 = vunpack.c.l.b16 %v1112
        %v1408 = vunpack.c.l.b16 %v1113
        %v1409 = vunpack.c.l.b16 %v1114
        %v1410 = vpack.c.b16 %v1267, %v1266
        %v1411 = vpack.c.b16 %v1269, %v1268
        %v1412 = vpack.c.b16 %v1271, %v1270
        %v1413 = vpack.c.b16 %v1273, %v1272
        %v1414 = vpack.c.b16 %v1275, %v1274
        %v1415 = vpack.c.b16 %v1277, %v1276
        %v1416 = vpack.c.b16 %v1279, %v1278
        %v1417 = vpack.c.b16 %v1281, %v1280
        %v1418 = vpack.c.b16 %v1283, %v1282
        %v1419 = vpack.c.b16 %v1285, %v1284
        %v1420 = vpack.c.b16 %v1287, %v1286
        %v1421 = vpack.c.b16 %v1289, %v1288
        %v1422 = vpack.c.b16 %v1291, %v1290
        %v1423 = vpack.c.b16 %v1293, %v1292
        %v1424 = vpack.c.b16 %v1295, %v1294
        %v1425 = vpack.c.b16 %v1297, %v1296
        %v1426 = vpack.c.b16 %v1299, %v1298
        %v1427 = vpack.c.b16 %v1301, %v1300
        %v1428 = vpack.c.b16 %v1303, %v1302
        %v1429 = vpack.c.b16 %v1305, %v1304
        %v1430 = vpack.c.b16 %v1307, %v1306
        %v1431 = vpack.c.b16 %v1309, %v1308
        %v1432 = vpack.c.b16 %v1311, %v1310
        %v1433 = vpack.c.b16 %v1313, %v1312
        %v1434 = vpack.c.b16 %v1315, %v1314
        %v1435 = vpack.c.b16 %v1317, %v1316
        %v1436 = vpack.c.b16 %v1319, %v1318
        %v1437 = vpack.c.b16 %v1321, %v1320
        %v1438 = vpack.c.b16 %v1323, %v1322
        %v1439 = vpack.c.b16 %v1325, %v1324
        %v1440 = vpack.c.b16 %v1327, %v1326
        %v1441 = vpack.c.b16 %v1329, %v1328
        %v1442 = vpack.c.b16 %v1331, %v1330
        %v1443 = vpack.c.b16 %v1333, %v1332
        %v1444 = vpack.c.b16 %v1335, %v1334
        %v1445 = vpack.c.b16 %v1337, %v1336
        %v1446 = vpack.c.b16 %v1339, %v1338
        %v1447 = vpack.c.b16 %v1341, %v1340
        %v1448 = vpack.c.b16 %v1343, %v1342
        %v1449 = vpack.c.b16 %v1345, %v1344
        %v1450 = vpack.c.b16 %v1347, %v1346
        %v1451 = vpack.c.b16 %v1349, %v1348
        %v1452 = vpack.c.b16 %v1351, %v1350
        %v1453 = vpack.c.b16 %v1353, %v1352
        %v1454 = vpack.c.b16 %v1355, %v1354
        %v1455 = vpack.c.b16 %v1357, %v1356
        %v1456 = vpack.c.b16 %v1359, %v1358
        %v1457 = vpack.c.b16 %v1361, %v1360
        %v1458 = vpack.c.b16 %v1363, %v1362
        %v1459 = vpack.c.b16 %v1365, %v1364
        %v1460 = vpack.c.b16 %v1367, %v1366
        %v1461 = vpack.c.b16 %v1369, %v1368
        %v1462 = vpack.c.b16 %v1371, %v1370
        %v1463 = vpack.c.b16 %v1373, %v1372
        %v1464 = vpack.c.b16 %v1375, %v1374
        %v1465 = vpack.c.b16 %v1377, %v1376
        %v1466 = vpack.c.b16 %v1379, %v1378
        %v1467 = vpack.c.b16 %v1381, %v1380
        %v1468 = vpack.c.b16 %v1383, %v1382
        %v1469 = vpack.c.b16 %v1385, %v1384
        %v1470 = vpack.c.b16 %v1387, %v1386
        %v1471 = vpack.c.b16 %v1389, %v1388
        %v1472 = vpack.c.b16 %v1391, %v1390
        %v1473 = vpack.c.b16 %v1393, %v1392
        %v1474 = vpack.c.b16 %v1395, %v1394
        %v1475 = vpack.c.b16 %v1397, %v1396
        %v1476 = vpack.c.b16 %v1399, %v1398
        %v1477 = vpack.c.b16 %v1401, %v1400
        %v1478 = vpack.c.b16 %v1403, %v1402
        %v1479 = vpack.c.b16 %v1405, %v1404
        %v1480 = vpack.c.b16 %v1407, %v1406
        %v1481 = vpack.c.b16 %v1409, %v1408
        %1554 = vmatprep.subr.bf16.mxu0 0
        %1555 = vmatpush1.bf16.msra.mxu0 %v1417
        %1556 = vmatprep.subr.bf16.mxu0 0
        %1557 = vmatpush1.bf16.msra.mxu0 %v1416
        %1558 = vmatprep.subr.bf16.mxu0 0
        %1559 = vmatpush1.bf16.msra.mxu0 %v1415
        %1560 = vmatprep.subr.bf16.mxu0 0
        %1561 = vmatpush1.bf16.msra.mxu0 %v1414
        %1562 = vmatprep.subr.bf16.mxu0 0
        %1563 = vmatpush1.bf16.msra.mxu0 %v1413
        %1564 = vmatprep.subr.bf16.mxu0 0
        %1565 = vmatpush1.bf16.msra.mxu0 %v1412
        %1566 = vmatprep.subr.bf16.mxu0 0
        %1567 = vmatpush1.bf16.msra.mxu0 %v1411
        %1568 = vmatprep.subr.bf16.mxu0 0
        %1569 = vmatpush1.bf16.msra.mxu0 %v1410
        %1570 = vmatprep.subr.bf16.mxu0 0
        %1571 = vmatpush2.bf16.msra.mxu0 %v1425
        %1572 = vmatprep.subr.bf16.mxu0 0
        %1573 = vmatpush2.bf16.msra.mxu0 %v1424
        %1574 = vmatprep.subr.bf16.mxu0 0
        %1575 = vmatpush2.bf16.msra.mxu0 %v1423
        %1576 = vmatprep.subr.bf16.mxu0 0
        %1577 = vmatpush2.bf16.msra.mxu0 %v1422
        %1578 = vmatprep.subr.bf16.mxu0 0
        %1579 = vmatpush2.bf16.msra.mxu0 %v1421
        %1580 = vmatprep.subr.bf16.mxu0 0
        %1581 = vmatpush2.bf16.msra.mxu0 %v1420
        %1582 = vmatprep.subr.bf16.mxu0 0
        %1583 = vmatpush2.bf16.msra.mxu0 %v1419
        %1584 = vmatprep.subr.bf16.mxu0 0
        %1585 = vmatpush2.bf16.msra.mxu0 %v1418
        %1586 = vmatprep.mubr.bf16.mxu0 %v731
        %1587 = vmatmul.mubr.bf16.gmra.mxu0 %v699
        %v1588 = vpop.f32.mrf.mxu0
        %v1589 = vadd.f32 %v1120, %v1588
        %v1590 = vpop.f32.mrf.mxu0
        %v1591 = vpop.f32.mrf.mxu0
        %v1592 = vadd.f32 %v1120, %v1591
        %v1593 = vpop.f32.mrf.mxu0
        %1594 = vmatprep.mubr.bf16.mxu0 %v732
        %1595 = vmatmul.mubr.bf16.gmra.mxu0 %v700
        %v1596 = vpop.f32.mrf.mxu0
        %v1597 = vadd.f32 %v1120, %v1596
        %v1598 = vpop.f32.mrf.mxu0
        %v1599 = vpop.f32.mrf.mxu0
        %v1600 = vadd.f32 %v1120, %v1599
        %v1601 = vpop.f32.mrf.mxu0
        %1602 = vmatprep.mubr.bf16.mxu0 %v733
        %1603 = vmatmul.mubr.bf16.gmra.mxu0 %v701
        %v1604 = vpop.f32.mrf.mxu0
        %v1605 = vadd.f32 %v1120, %v1604
        %v1606 = vpop.f32.mrf.mxu0
        %v1607 = vpop.f32.mrf.mxu0
        %v1608 = vadd.f32 %v1120, %v1607
        %v1609 = vpop.f32.mrf.mxu0
        %1610 = vmatprep.mubr.bf16.mxu0 %v734
        %1611 = vmatmul.mubr.bf16.gmra.mxu0 %v702
        %v1612 = vpop.f32.mrf.mxu0
        %v1613 = vadd.f32 %v1120, %v1612
        %v1614 = vpop.f32.mrf.mxu0
        %v1615 = vpop.f32.mrf.mxu0
        %v1616 = vadd.f32 %v1120, %v1615
        %v1617 = vpop.f32.mrf.mxu0
        %1618 = vmatprep.mubr.bf16.mxu0 %v735
        %1619 = vmatmul.mubr.bf16.gmra.mxu0 %v703
        %v1620 = vpop.f32.mrf.mxu0
        %v1621 = vadd.f32 %v1120, %v1620
        %v1622 = vpop.f32.mrf.mxu0
        %v1623 = vpop.f32.mrf.mxu0
        %v1624 = vadd.f32 %v1120, %v1623
        %v1625 = vpop.f32.mrf.mxu0
        %1626 = vmatprep.mubr.bf16.mxu0 %v736
        %1627 = vmatmul.mubr.bf16.gmra.mxu0 %v704
        %v1628 = vpop.f32.mrf.mxu0
        %v1629 = vadd.f32 %v1120, %v1628
        %v1630 = vpop.f32.mrf.mxu0
        %v1631 = vpop.f32.mrf.mxu0
        %v1632 = vadd.f32 %v1120, %v1631
        %v1633 = vpop.f32.mrf.mxu0
        %1634 = vmatprep.mubr.bf16.mxu0 %v737
        %1635 = vmatmul.mubr.bf16.gmra.mxu0 %v705
        %v1636 = vpop.f32.mrf.mxu0
        %v1637 = vadd.f32 %v1120, %v1636
        %v1638 = vpop.f32.mrf.mxu0
        %v1639 = vpop.f32.mrf.mxu0
        %v1640 = vadd.f32 %v1120, %v1639
        %v1641 = vpop.f32.mrf.mxu0
        %1642 = vmatprep.mubr.bf16.mxu0 %v738
        %1643 = vmatmul.mubr.bf16.gmra.mxu0 %v706
        %v1644 = vpop.f32.mrf.mxu0
        %v1645 = vadd.f32 %v1120, %v1644
        %v1646 = vpop.f32.mrf.mxu0
        %v1647 = vpop.f32.mrf.mxu0
        %v1648 = vadd.f32 %v1120, %v1647
        %v1649 = vpop.f32.mrf.mxu0
        %1650 = vdwg.mxu0
        %1651 = vmatprep.subr.bf16.mxu0 0
        %1652 = vmatpush1.bf16.msra.mxu0 %v1433
        %1653 = vmatprep.subr.bf16.mxu0 0
        %1654 = vmatpush1.bf16.msra.mxu0 %v1432
        %1655 = vmatprep.subr.bf16.mxu0 0
        %1656 = vmatpush1.bf16.msra.mxu0 %v1431
        %1657 = vmatprep.subr.bf16.mxu0 0
        %1658 = vmatpush1.bf16.msra.mxu0 %v1430
        %1659 = vmatprep.subr.bf16.mxu0 0
        %1660 = vmatpush1.bf16.msra.mxu0 %v1429
        %1661 = vmatprep.subr.bf16.mxu0 0
        %1662 = vmatpush1.bf16.msra.mxu0 %v1428
        %1663 = vmatprep.subr.bf16.mxu0 0
        %1664 = vmatpush1.bf16.msra.mxu0 %v1427
        %1665 = vmatprep.subr.bf16.mxu0 0
        %1666 = vmatpush1.bf16.msra.mxu0 %v1426
        %1667 = vmatprep.subr.bf16.mxu0 0
        %1668 = vmatpush2.bf16.msra.mxu0 %v1441
        %1669 = vmatprep.subr.bf16.mxu0 0
        %1670 = vmatpush2.bf16.msra.mxu0 %v1440
        %1671 = vmatprep.subr.bf16.mxu0 0
        %1672 = vmatpush2.bf16.msra.mxu0 %v1439
        %1673 = vmatprep.subr.bf16.mxu0 0
        %1674 = vmatpush2.bf16.msra.mxu0 %v1438
        %1675 = vmatprep.subr.bf16.mxu0 0
        %1676 = vmatpush2.bf16.msra.mxu0 %v1437
        %1677 = vmatprep.subr.bf16.mxu0 0
        %1678 = vmatpush2.bf16.msra.mxu0 %v1436
        %1679 = vmatprep.subr.bf16.mxu0 0
        %1680 = vmatpush2.bf16.msra.mxu0 %v1435
        %1681 = vmatprep.subr.bf16.mxu0 0
        %1682 = vmatpush2.bf16.msra.mxu0 %v1434
        %1683 = vmatprep.mubr.bf16.mxu0 %v795
        %1684 = vmatmul.mubr.bf16.gmra.mxu0 %v763
        %v1685 = vpop.f32.mrf.mxu0
        %v1686 = vadd.f32 %v1589, %v1685
        %v1687 = vpop.f32.mrf.mxu0
        %v1688 = vpop.f32.mrf.mxu0
        %v1689 = vadd.f32 %v1592, %v1688
        %v1690 = vpop.f32.mrf.mxu0
        %1691 = vmatprep.mubr.bf16.mxu0 %v796
        %1692 = vmatmul.mubr.bf16.gmra.mxu0 %v764
        %v1693 = vpop.f32.mrf.mxu0
        %v1694 = vadd.f32 %v1597, %v1693
        %v1695 = vpop.f32.mrf.mxu0
        %v1696 = vpop.f32.mrf.mxu0
        %v1697 = vadd.f32 %v1600, %v1696
        %v1698 = vpop.f32.mrf.mxu0
        %1699 = vmatprep.mubr.bf16.mxu0 %v797
        %1700 = vmatmul.mubr.bf16.gmra.mxu0 %v765
        %v1701 = vpop.f32.mrf.mxu0
        %v1702 = vadd.f32 %v1605, %v1701
        %v1703 = vpop.f32.mrf.mxu0
        %v1704 = vpop.f32.mrf.mxu0
        %v1705 = vadd.f32 %v1608, %v1704
        %v1706 = vpop.f32.mrf.mxu0
        %1707 = vmatprep.mubr.bf16.mxu0 %v798
        %1708 = vmatmul.mubr.bf16.gmra.mxu0 %v766
        %v1709 = vpop.f32.mrf.mxu0
        %v1710 = vadd.f32 %v1613, %v1709
        %v1711 = vpop.f32.mrf.mxu0
        %v1712 = vpop.f32.mrf.mxu0
        %v1713 = vadd.f32 %v1616, %v1712
        %v1714 = vpop.f32.mrf.mxu0
        %1715 = vmatprep.mubr.bf16.mxu0 %v799
        %1716 = vmatmul.mubr.bf16.gmra.mxu0 %v767
        %v1717 = vpop.f32.mrf.mxu0
        %v1718 = vadd.f32 %v1621, %v1717
        %v1719 = vpop.f32.mrf.mxu0
        %v1720 = vpop.f32.mrf.mxu0
        %v1721 = vadd.f32 %v1624, %v1720
        %v1722 = vpop.f32.mrf.mxu0
        %1723 = vmatprep.mubr.bf16.mxu0 %v800
        %1724 = vmatmul.mubr.bf16.gmra.mxu0 %v768
        %v1725 = vpop.f32.mrf.mxu0
        %v1726 = vadd.f32 %v1629, %v1725
        %v1727 = vpop.f32.mrf.mxu0
        %v1728 = vpop.f32.mrf.mxu0
        %v1729 = vadd.f32 %v1632, %v1728
        %v1730 = vpop.f32.mrf.mxu0
        %1731 = vmatprep.mubr.bf16.mxu0 %v801
        %1732 = vmatmul.mubr.bf16.gmra.mxu0 %v769
        %v1733 = vpop.f32.mrf.mxu0
        %v1734 = vadd.f32 %v1637, %v1733
        %v1735 = vpop.f32.mrf.mxu0
        %v1736 = vpop.f32.mrf.mxu0
        %v1737 = vadd.f32 %v1640, %v1736
        %v1738 = vpop.f32.mrf.mxu0
        %1739 = vmatprep.mubr.bf16.mxu0 %v802
        %1740 = vmatmul.mubr.bf16.gmra.mxu0 %v770
        %v1741 = vpop.f32.mrf.mxu0
        %v1742 = vadd.f32 %v1645, %v1741
        %v1743 = vpop.f32.mrf.mxu0
        %v1744 = vpop.f32.mrf.mxu0
        %v1745 = vadd.f32 %v1648, %v1744
        %v1746 = vpop.f32.mrf.mxu0
        %1747 = vdwg.mxu0
        %1748 = vmatprep.subr.bf16.mxu0 0
        %1749 = vmatpush1.bf16.msra.mxu0 %v1449
        %1750 = vmatprep.subr.bf16.mxu0 0
        %1751 = vmatpush1.bf16.msra.mxu0 %v1448
        %1752 = vmatprep.subr.bf16.mxu0 0
        %1753 = vmatpush1.bf16.msra.mxu0 %v1447
        %1754 = vmatprep.subr.bf16.mxu0 0
        %1755 = vmatpush1.bf16.msra.mxu0 %v1446
        %1756 = vmatprep.subr.bf16.mxu0 0
        %1757 = vmatpush1.bf16.msra.mxu0 %v1445
        %1758 = vmatprep.subr.bf16.mxu0 0
        %1759 = vmatpush1.bf16.msra.mxu0 %v1444
        %1760 = vmatprep.subr.bf16.mxu0 0
        %1761 = vmatpush1.bf16.msra.mxu0 %v1443
        %1762 = vmatprep.subr.bf16.mxu0 0
        %1763 = vmatpush1.bf16.msra.mxu0 %v1442
        %1764 = vmatprep.subr.bf16.mxu0 0
        %1765 = vmatpush2.bf16.msra.mxu0 %v1457
        %1766 = vmatprep.subr.bf16.mxu0 0
        %1767 = vmatpush2.bf16.msra.mxu0 %v1456
        %1768 = vmatprep.subr.bf16.mxu0 0
        %1769 = vmatpush2.bf16.msra.mxu0 %v1455
        %1770 = vmatprep.subr.bf16.mxu0 0
        %1771 = vmatpush2.bf16.msra.mxu0 %v1454
        %1772 = vmatprep.subr.bf16.mxu0 0
        %1773 = vmatpush2.bf16.msra.mxu0 %v1453
        %1774 = vmatprep.subr.bf16.mxu0 0
        %1775 = vmatpush2.bf16.msra.mxu0 %v1452
        %1776 = vmatprep.subr.bf16.mxu0 0
        %1777 = vmatpush2.bf16.msra.mxu0 %v1451
        %1778 = vmatprep.subr.bf16.mxu0 0
        %1779 = vmatpush2.bf16.msra.mxu0 %v1450
        %1780 = vmatprep.mubr.bf16.mxu0 %v859
        %1781 = vmatmul.mubr.bf16.gmra.mxu0 %v827
        %v1782 = vpop.f32.mrf.mxu0
        %v1783 = vadd.f32 %v1686, %v1782
        %v1784 = vpop.f32.mrf.mxu0
        %v1785 = vpop.f32.mrf.mxu0
        %v1786 = vadd.f32 %v1689, %v1785
        %v1787 = vpop.f32.mrf.mxu0
        %1788 = vmatprep.mubr.bf16.mxu0 %v860
        %1789 = vmatmul.mubr.bf16.gmra.mxu0 %v828
        %v1790 = vpop.f32.mrf.mxu0
        %v1791 = vadd.f32 %v1694, %v1790
        %v1792 = vpop.f32.mrf.mxu0
        %v1793 = vpop.f32.mrf.mxu0
        %v1794 = vadd.f32 %v1697, %v1793
        %v1795 = vpop.f32.mrf.mxu0
        %1796 = vmatprep.mubr.bf16.mxu0 %v861
        %1797 = vmatmul.mubr.bf16.gmra.mxu0 %v829
        %v1798 = vpop.f32.mrf.mxu0
        %v1799 = vadd.f32 %v1702, %v1798
        %v1800 = vpop.f32.mrf.mxu0
        %v1801 = vpop.f32.mrf.mxu0
        %v1802 = vadd.f32 %v1705, %v1801
        %v1803 = vpop.f32.mrf.mxu0
        %1804 = vmatprep.mubr.bf16.mxu0 %v862
        %1805 = vmatmul.mubr.bf16.gmra.mxu0 %v830
        %v1806 = vpop.f32.mrf.mxu0
        %v1807 = vadd.f32 %v1710, %v1806
        %v1808 = vpop.f32.mrf.mxu0
        %v1809 = vpop.f32.mrf.mxu0
        %v1810 = vadd.f32 %v1713, %v1809
        %v1811 = vpop.f32.mrf.mxu0
        %1812 = vmatprep.mubr.bf16.mxu0 %v863
        %1813 = vmatmul.mubr.bf16.gmra.mxu0 %v831
        %v1814 = vpop.f32.mrf.mxu0
        %v1815 = vadd.f32 %v1718, %v1814
        %v1816 = vpop.f32.mrf.mxu0
        %v1817 = vpop.f32.mrf.mxu0
        %v1818 = vadd.f32 %v1721, %v1817
        %v1819 = vpop.f32.mrf.mxu0
        %1820 = vmatprep.mubr.bf16.mxu0 %v864
        %1821 = vmatmul.mubr.bf16.gmra.mxu0 %v832
        %v1822 = vpop.f32.mrf.mxu0
        %v1823 = vadd.f32 %v1726, %v1822
        %v1824 = vpop.f32.mrf.mxu0
        %v1825 = vpop.f32.mrf.mxu0
        %v1826 = vadd.f32 %v1729, %v1825
        %v1827 = vpop.f32.mrf.mxu0
        %1828 = vmatprep.mubr.bf16.mxu0 %v865
        %1829 = vmatmul.mubr.bf16.gmra.mxu0 %v833
        %v1830 = vpop.f32.mrf.mxu0
        %v1831 = vadd.f32 %v1734, %v1830
        %v1832 = vpop.f32.mrf.mxu0
        %v1833 = vpop.f32.mrf.mxu0
        %v1834 = vadd.f32 %v1737, %v1833
        %v1835 = vpop.f32.mrf.mxu0
        %1836 = vmatprep.mubr.bf16.mxu0 %v866
        %1837 = vmatmul.mubr.bf16.gmra.mxu0 %v834
        %v1838 = vpop.f32.mrf.mxu0
        %v1839 = vadd.f32 %v1742, %v1838
        %v1840 = vpop.f32.mrf.mxu0
        %v1841 = vpop.f32.mrf.mxu0
        %v1842 = vadd.f32 %v1745, %v1841
        %v1843 = vpop.f32.mrf.mxu0
        %1844 = vdwg.mxu0
        %1845 = vmatprep.subr.bf16.mxu0 0
        %1846 = vmatpush1.bf16.msra.mxu0 %v1465
        %1847 = vmatprep.subr.bf16.mxu0 0
        %1848 = vmatpush1.bf16.msra.mxu0 %v1464
        %1849 = vmatprep.subr.bf16.mxu0 0
        %1850 = vmatpush1.bf16.msra.mxu0 %v1463
        %1851 = vmatprep.subr.bf16.mxu0 0
        %1852 = vmatpush1.bf16.msra.mxu0 %v1462
        %1853 = vmatprep.subr.bf16.mxu0 0
        %1854 = vmatpush1.bf16.msra.mxu0 %v1461
        %1855 = vmatprep.subr.bf16.mxu0 0
        %1856 = vmatpush1.bf16.msra.mxu0 %v1460
        %1857 = vmatprep.subr.bf16.mxu0 0
        %1858 = vmatpush1.bf16.msra.mxu0 %v1459
        %1859 = vmatprep.subr.bf16.mxu0 0
        %1860 = vmatpush1.bf16.msra.mxu0 %v1458
        %1861 = vmatprep.subr.bf16.mxu0 0
        %1862 = vmatpush2.bf16.msra.mxu0 %v1473
        %1863 = vmatprep.subr.bf16.mxu0 0
        %1864 = vmatpush2.bf16.msra.mxu0 %v1472
        %1865 = vmatprep.subr.bf16.mxu0 0
        %1866 = vmatpush2.bf16.msra.mxu0 %v1471
        %1867 = vmatprep.subr.bf16.mxu0 0
        %1868 = vmatpush2.bf16.msra.mxu0 %v1470
        %1869 = vmatprep.subr.bf16.mxu0 0
        %1870 = vmatpush2.bf16.msra.mxu0 %v1469
        %1871 = vmatprep.subr.bf16.mxu0 0
        %1872 = vmatpush2.bf16.msra.mxu0 %v1468
        %1873 = vmatprep.subr.bf16.mxu0 0
        %1874 = vmatpush2.bf16.msra.mxu0 %v1467
        %1875 = vmatprep.subr.bf16.mxu0 0
        %1876 = vmatpush2.bf16.msra.mxu0 %v1466
        %1877 = vmatprep.mubr.bf16.mxu0 %v923
        %1878 = vmatmul.mubr.bf16.gmra.mxu0 %v891
        %v1879 = vpop.f32.mrf.mxu0
        %v1880 = vadd.f32 %v1783, %v1879
        %v1881 = vpop.f32.mrf.mxu0
        %v1882 = vpop.f32.mrf.mxu0
        %v1883 = vadd.f32 %v1786, %v1882
        %v1884 = vpop.f32.mrf.mxu0
        %1885 = vmatprep.mubr.bf16.mxu0 %v924
        %1886 = vmatmul.mubr.bf16.gmra.mxu0 %v892
        %v1887 = vpop.f32.mrf.mxu0
        %v1888 = vadd.f32 %v1791, %v1887
        %v1889 = vpop.f32.mrf.mxu0
        %v1890 = vpop.f32.mrf.mxu0
        %v1891 = vadd.f32 %v1794, %v1890
        %v1892 = vpop.f32.mrf.mxu0
        %1893 = vmatprep.mubr.bf16.mxu0 %v925
        %1894 = vmatmul.mubr.bf16.gmra.mxu0 %v893
        %v1895 = vpop.f32.mrf.mxu0
        %v1896 = vadd.f32 %v1799, %v1895
        %v1897 = vpop.f32.mrf.mxu0
        %v1898 = vpop.f32.mrf.mxu0
        %v1899 = vadd.f32 %v1802, %v1898
        %v1900 = vpop.f32.mrf.mxu0
        %1901 = vmatprep.mubr.bf16.mxu0 %v926
        %1902 = vmatmul.mubr.bf16.gmra.mxu0 %v894
        %v1903 = vpop.f32.mrf.mxu0
        %v1904 = vadd.f32 %v1807, %v1903
        %v1905 = vpop.f32.mrf.mxu0
        %v1906 = vpop.f32.mrf.mxu0
        %v1907 = vadd.f32 %v1810, %v1906
        %v1908 = vpop.f32.mrf.mxu0
        %1909 = vmatprep.mubr.bf16.mxu0 %v927
        %1910 = vmatmul.mubr.bf16.gmra.mxu0 %v895
        %v1911 = vpop.f32.mrf.mxu0
        %v1912 = vadd.f32 %v1815, %v1911
        %v1913 = vpop.f32.mrf.mxu0
        %v1914 = vpop.f32.mrf.mxu0
        %v1915 = vadd.f32 %v1818, %v1914
        %v1916 = vpop.f32.mrf.mxu0
        %1917 = vmatprep.mubr.bf16.mxu0 %v928
        %1918 = vmatmul.mubr.bf16.gmra.mxu0 %v896
        %v1919 = vpop.f32.mrf.mxu0
        %v1920 = vadd.f32 %v1823, %v1919
        %v1921 = vpop.f32.mrf.mxu0
        %v1922 = vpop.f32.mrf.mxu0
        %v1923 = vadd.f32 %v1826, %v1922
        %v1924 = vpop.f32.mrf.mxu0
        %1925 = vmatprep.mubr.bf16.mxu0 %v929
        %1926 = vmatmul.mubr.bf16.gmra.mxu0 %v897
        %v1927 = vpop.f32.mrf.mxu0
        %v1928 = vadd.f32 %v1831, %v1927
        %v1929 = vpop.f32.mrf.mxu0
        %v1930 = vpop.f32.mrf.mxu0
        %v1931 = vadd.f32 %v1834, %v1930
        %v1932 = vpop.f32.mrf.mxu0
        %1933 = vmatprep.mubr.bf16.mxu0 %v930
        %1934 = vmatmul.mubr.bf16.gmra.mxu0 %v898
        %v1935 = vpop.f32.mrf.mxu0
        %v1936 = vadd.f32 %v1839, %v1935
        %v1937 = vpop.f32.mrf.mxu0
        %v1938 = vpop.f32.mrf.mxu0
        %v1939 = vadd.f32 %v1842, %v1938
        %v1940 = vpop.f32.mrf.mxu0
        %1941 = vdwg.mxu0
        %1942 = vmatprep.subr.bf16.mxu0 0
        %1943 = vmatpush1.bf16.msra.mxu0 %v1481
        %1944 = vmatprep.subr.bf16.mxu0 0
        %1945 = vmatpush1.bf16.msra.mxu0 %v1480
        %1946 = vmatprep.subr.bf16.mxu0 0
        %1947 = vmatpush1.bf16.msra.mxu0 %v1479
        %1948 = vmatprep.subr.bf16.mxu0 0
        %1949 = vmatpush1.bf16.msra.mxu0 %v1478
        %1950 = vmatprep.subr.bf16.mxu0 0
        %1951 = vmatpush1.bf16.msra.mxu0 %v1477
        %1952 = vmatprep.subr.bf16.mxu0 0
        %1953 = vmatpush1.bf16.msra.mxu0 %v1476
        %1954 = vmatprep.subr.bf16.mxu0 0
        %1955 = vmatpush1.bf16.msra.mxu0 %v1475
        %1956 = vmatprep.subr.bf16.mxu0 0
        %1957 = vmatpush1.bf16.msra.mxu0 %v1474
        %1958 = vmatprep.subr.bf16.mxu0 0
        %1959 = vmatpush2.bf16.msra.mxu0 0
        %1960 = vmatprep.subr.bf16.mxu0 0
        %1961 = vmatpush2.bf16.msra.mxu0 0
        %1962 = vmatprep.subr.bf16.mxu0 0
        %1963 = vmatpush2.bf16.msra.mxu0 0
        %1964 = vmatprep.subr.bf16.mxu0 0
        %1965 = vmatpush2.bf16.msra.mxu0 0
        %1966 = vmatprep.subr.bf16.mxu0 0
        %1967 = vmatpush2.bf16.msra.mxu0 0
        %1968 = vmatprep.subr.bf16.mxu0 0
        %1969 = vmatpush2.bf16.msra.mxu0 0
        %1970 = vmatprep.subr.bf16.mxu0 0
        %1971 = vmatpush2.bf16.msra.mxu0 0
        %1972 = vmatprep.subr.bf16.mxu0 0
        %1973 = vmatpush2.bf16.msra.mxu0 0
        %1974 = vmatprep.mubr.bf16.mxu0 0
        %1975 = vmatmul.mubr.bf16.gmra.mxu0 %v955
        %v1976 = vpop.f32.mrf.mxu0
        %v1977 = vadd.f32 %v1880, %v1976
        %v1978 = vpop.f32.mrf.mxu0
        %v1979 = vpop.f32.mrf.mxu0
        %v1980 = vadd.f32 %v1883, %v1979
        %v1981 = vpop.f32.mrf.mxu0
        %1982 = vmatprep.mubr.bf16.mxu0 0
        %1983 = vmatmul.mubr.bf16.gmra.mxu0 %v956
        %v1984 = vpop.f32.mrf.mxu0
        %v1985 = vadd.f32 %v1888, %v1984
        %v1986 = vpop.f32.mrf.mxu0
        %v1987 = vpop.f32.mrf.mxu0
        %v1988 = vadd.f32 %v1891, %v1987
        %v1989 = vpop.f32.mrf.mxu0
        %1990 = vmatprep.mubr.bf16.mxu0 0
        %1991 = vmatmul.mubr.bf16.gmra.mxu0 %v957
        %v1992 = vpop.f32.mrf.mxu0
        %v1993 = vadd.f32 %v1896, %v1992
        %v1994 = vpop.f32.mrf.mxu0
        %v1995 = vpop.f32.mrf.mxu0
        %v1996 = vadd.f32 %v1899, %v1995
        %v1997 = vpop.f32.mrf.mxu0
        %1998 = vmatprep.mubr.bf16.mxu0 0
        %1999 = vmatmul.mubr.bf16.gmra.mxu0 %v958
        %v2000 = vpop.f32.mrf.mxu0
        %v2001 = vadd.f32 %v1904, %v2000
        %v2002 = vpop.f32.mrf.mxu0
        %v2003 = vpop.f32.mrf.mxu0
        %v2004 = vadd.f32 %v1907, %v2003
        %v2005 = vpop.f32.mrf.mxu0
        %2006 = vmatprep.mubr.bf16.mxu0 0
        %2007 = vmatmul.mubr.bf16.gmra.mxu0 %v959
        %v2008 = vpop.f32.mrf.mxu0
        %v2009 = vadd.f32 %v1912, %v2008
        %v2010 = vpop.f32.mrf.mxu0
        %v2011 = vpop.f32.mrf.mxu0
        %v2012 = vadd.f32 %v1915, %v2011
        %v2013 = vpop.f32.mrf.mxu0
        %2014 = vmatprep.mubr.bf16.mxu0 0
        %2015 = vmatmul.mubr.bf16.gmra.mxu0 %v960
        %v2016 = vpop.f32.mrf.mxu0
        %v2017 = vadd.f32 %v1920, %v2016
        %v2018 = vpop.f32.mrf.mxu0
        %v2019 = vpop.f32.mrf.mxu0
        %v2020 = vadd.f32 %v1923, %v2019
        %v2021 = vpop.f32.mrf.mxu0
        %2022 = vmatprep.mubr.bf16.mxu0 0
        %2023 = vmatmul.mubr.bf16.gmra.mxu0 %v961
        %v2024 = vpop.f32.mrf.mxu0
        %v2025 = vadd.f32 %v1928, %v2024
        %v2026 = vpop.f32.mrf.mxu0
        %v2027 = vpop.f32.mrf.mxu0
        %v2028 = vadd.f32 %v1931, %v2027
        %v2029 = vpop.f32.mrf.mxu0
        %2030 = vmatprep.mubr.bf16.mxu0 0
        %2031 = vmatmul.mubr.bf16.gmra.mxu0 %v962
        %v2032 = vpop.f32.mrf.mxu0
        %v2033 = vadd.f32 %v1936, %v2032
        %v2034 = vpop.f32.mrf.mxu0
        %v2035 = vpop.f32.mrf.mxu0
        %v2036 = vadd.f32 %v1939, %v2035
        %v2037 = vpop.f32.mrf.mxu0
        %2038 = vdwg.mxu0
        %v2039 = vmax.f32 %v1977, 0.0
        %v2040 = vmax.f32 %v1980, 0.0
        %v2041 = vmax.f32 %v1985, 0.0
        %v2042 = vmax.f32 %v1988, 0.0
        %v2043 = vmax.f32 %v1993, 0.0
        %v2044 = vmax.f32 %v1996, 0.0
        %v2045 = vmax.f32 %v2001, 0.0
        %v2046 = vmax.f32 %v2004, 0.0
        %v2047 = vmax.f32 %v2009, 0.0
        %v2048 = vmax.f32 %v2012, 0.0
        %v2049 = vmax.f32 %v2017, 0.0
        %v2050 = vmax.f32 %v2020, 0.0
        %v2051 = vmax.f32 %v2025, 0.0
        %v2052 = vmax.f32 %v2028, 0.0
        %v2053 = vmax.f32 %v2033, 0.0
        %v2054 = vmax.f32 %v2036, 0.0
        %2055 = vst [vmem:[%s177] sm:$0xff] %v2039
        %2056 = vst [vmem:[%s177 + $0x8] sm:$0xff] %v2040
        %2057 = vst [vmem:[%s177 + $0x10] sm:$0xff] %v2041
        %2058 = vst [vmem:[%s177 + $0x18] sm:$0xff] %v2042
        %2059 = vst [vmem:[%s177 + $0x20] sm:$0xff] %v2043
        %2060 = vst [vmem:[%s177 + $0x28] sm:$0xff] %v2044
        %2061 = vst [vmem:[%s177 + $0x30] sm:$0xff] %v2045
        %2062 = vst [vmem:[%s177 + $0x38] sm:$0xff] %v2046
        %2063 = vst [vmem:[%s177 + $0x40] sm:$0xff] %v2047
        %2064 = vst [vmem:[%s177 + $0x48] sm:$0xff] %v2048
        %2065 = vst [vmem:[%s177 + $0x50] sm:$0xff] %v2049
        %2066 = vst [vmem:[%s177 + $0x58] sm:$0xff] %v2050
        %2067 = vst [vmem:[%s177 + $0x60] sm:$0xff] %v2051
        %2068 = vst [vmem:[%s177 + $0x68] sm:$0xff] %v2052
        %2069 = vst [vmem:[%s177 + $0x70] sm:$0xff] %v2053
        %2070 = vst [vmem:[%s177 + $0x78] sm:$0xff] %v2054
        %s2071 = sand.u32 %s107, 1
        %s2072 = scalar_lea.sflag [#allocation3], %s2071
        %s2073 = sand.u32 %s107, 1
        %s2074 = smul.addr %s2073, 128
        %s2075 = scalar_lea.vmem [#allocation2], %s2074
        // Predicated region
        $region33: #{tpu_custom_call.1} parent=31 // pred_check
          %p2076 = pneg %p117
        $region34: #{tpu_custom_call.1} parent=31 // pred_check_branch
          %2078 = sbr.rel (%p2076) target = $region36
        $region35: #{tpu_custom_call.1} parent=31 // pred_region
          %s2079 = smul.u32 8, %s22
          %s2081 = ssub.s32 2048, 2048
          %2082 = vsyncadd %s2072, %s2081
          %s2083 = smul.addr %s2079, 2
          %s2084 = smul.addr %s21, 32
          %s2085 = sadd.s32 %s2083, %s2084
          %s2086 = smul.addr %s2085, 128
          %s2087 = scalar_lea.hbm %s3, %s2086
          %s2088 = sshll.u32 %s2075, 4
          %s2089 = int_to_ptr.vmem [resolvable:$true] %s2088
          %2094 = dma.vmem_to_hbm [thread:$0]  %s2089, 2048, %s2087, %s2072, 128, 128, 8
        $region36: #{tpu_custom_call.1} parent=31 // pred_fallthru
          _
      $region32: #{tpu_custom_call.1} parent=5 // pred_fallthru
        _
      %p2095 = scmp.le.s32.totalorder 2, %s12
      // Predicated region
      $region37: #{tpu_custom_call.1} parent=5 // pred_check
        %p2096 = pneg %p2095
      $region38: #{tpu_custom_call.1} parent=5 // pred_check_branch
        %2098 = sbr.rel (%p2096) target = $region40
      $region39: #{tpu_custom_call.1} parent=5 // pred_region
        %s2099 = ssub.s32 %s12, 2
        // Predicated region
        $region41: #{tpu_custom_call.1} parent=39 // pred_check
          %p2100 = pneg %p123
        $region42: #{tpu_custom_call.1} parent=39 // pred_check_branch
          %2102 = sbr.rel (%p2100) target = $region44
        $region43: #{tpu_custom_call.1} parent=39 // pred_region
          %s2103 = sand.u32 %s108, 1
          %s2104 = scalar_lea.sflag [#allocation3], %s2103
          %s2105 = sand.u32 %s108, 1
          %s2106 = smul.addr %s2105, 128
          %s2107 = scalar_lea.vmem [#allocation2], %s2106
          %2108 = dma.done %s2104, 2048
        $region44: #{tpu_custom_call.1} parent=39 // pred_fallthru
          _
      $region40: #{tpu_custom_call.1} parent=5 // pred_fallthru
        _
    $region6: #{tpu_custom_call.1} parent=1 // loop_footer
      %s16 = sadd.s32 1, %s12
    $region7: #{tpu_custom_call.1} parent=1 // loop_footer_branch
      %11 = sbr.rel target = $region3
    $region8: #{tpu_custom_call.1} parent=1 // loop_exit
      _
    %2109 = vsyncpa [#allocation3], 1
    %s2110 = scalar_lea.sflag [#allocation3], 1
    %2111 = vsyncpa %s2110, 1

</llo_original>
